<compile_context>
chip_gen: v7x
topology: tpu7x:2x2x1
jax: 0.10.0
libtpu: 0.0.40
codegen_flags: <defaults>
</compile_context>

<pallas_src>
import functools

import jax
import jax.numpy as jnp
from jax import lax
from jax.experimental import pallas as pl
from jax.experimental.pallas import tpu as pltpu

# Explicit VMEM budget: v7x has 64 MiB physical / 32 MiB scoped-default, so we
# keep per-step (double-buffered) blocks well under that and raise the scoped
# limit explicitly (safe on v5e/v6e too, which have 128 MiB physical).
_VMEM_LIMIT_BYTES = 40 * 1024 * 1024
_TILE_BUDGET_BYTES = 12 * 1024 * 1024   # per-step block-buffer budget


def _pick_batch_tile(batch, per_slab_bytes, budget_bytes=_TILE_BUDGET_BYTES):
    """Largest divisor of `batch` whose per-step tile fits the VMEM budget.

    Keeps >= 2 grid steps when possible so the 'parallel' batch axis can be
    sharded across both v7x TensorCores (no effect on single-core v5e/v6e).
    """
    cap = max(1, budget_bytes // max(per_slab_bytes, 1))
    divisors = [d for d in range(1, batch + 1) if batch % d == 0 and d <= cap]
    tb = max(divisors)
    if tb == batch and batch > 1:
        smaller = [d for d in divisors if d < batch]
        if smaller:
            tb = max(smaller)
    return tb


def _block_toeplitz_weights(weight, W):
    """Conv3d weight (Cout, Cin, 1, 3, 3) -> (3, W*Cin, W*Cout) banded matrices.

    w_mat[kh, wi*Cin + ci, w*Cout + co] = weight[co, ci, 0, kh, wi - w + 1]
    for |wi - w| <= 1 and 0 elsewhere, i.e. the kw taps and the width-1 zero
    padding along W are folded into a block-Toeplitz matrix, turning the whole
    spatial conv into 3 dense matmuls with K=W*Cin and N=W*Cout.
    """
    Cout, Cin = weight.shape[0], weight.shape[1]
    w_k = jnp.transpose(weight[:, :, 0], (2, 3, 1, 0))          # (3,3,Cin,Cout) [kh,kw,ci,co]
    band = jnp.broadcast_to(w_k[:, None], (3, W, 3, Cin, Cout))
    tail = jnp.zeros((3, W, W, Cin, Cout), dtype=weight.dtype)
    rows = jnp.concatenate([band, tail], axis=2)                # (3, W, W+3, Cin, Cout)
    rows = rows.reshape(3, W * (W + 3), Cin, Cout)[:, :W * (W + 2)]
    t_pad = rows.reshape(3, W, W + 2, Cin, Cout)                # [kh, w, wp] = w_k[kh, wp-w]
    t = t_pad[:, :, 1:W + 1]                                    # drop padded cols -> [kh, w, wi]
    return jnp.transpose(t, (0, 2, 3, 1, 4)).reshape(3, W * Cin, W * Cout)


# ----------------------------------------------------------------------------
# Kernel 1: conv(1x3x3) + bias + per-tile BatchNorm partial sums.
# ----------------------------------------------------------------------------
def conv_bn_stats_kernel(x_ref, w_ref, b_ref, o_ref, stat_ref, xpad_ref):
    # x_ref   : (TB, H, W*Cin)      bf16  input slab (channels fused with W on lanes)
    # w_ref   : (3, W*Cin, W*Cout)  bf16  block-Toeplitz weights (constant -> DMA'd once)
    # b_ref   : (1, W*Cout)         f32   bias pre-tiled to the lane layout
    # o_ref   : (TB, H, W*Cout)     bf16  conv+bias output (lane-dense)
    # stat_ref: (1, 2, W*Cout)      f32   per-tile [sum, sum_sq] (lane-dense)
    # xpad_ref: (TB, H+2, W*Cin)    bf16  VMEM scratch: in-kernel H zero-padding
    TB, H, L = x_ref.shape
    WCout = o_ref.shape[2]

    # In-kernel zero padding along H replaces the old padded HBM copy.  The
    # scratch is fully (re)written every step, so it is safe under 'parallel'
    # grid scheduling on megacore.
    zero_row = jnp.zeros((TB, 1, L), dtype=x_ref.dtype)
    xpad_ref[:, 0:1, :] = zero_row
    xpad_ref[:, H + 1:H + 2, :] = zero_row
    xpad_ref[:, 1:H + 1, :] = x_ref[...]

    # 3 matmuls (one per kh tap), K = W*Cin, N = W*Cout, f32 accumulation.
    acc = jnp.zeros((TB * H, WCout), dtype=jnp.float32)
    for kh in range(3):
        rows = xpad_ref[:, kh:kh + H, :].reshape(TB * H, L)
        acc = acc + jnp.dot(rows, w_ref[kh], preferred_element_type=jnp.float32)
    acc = acc + b_ref[...]                                      # (1, W*Cout) broadcast

    o_ref[...] = acc.reshape(TB, H, WCout).astype(o_ref.dtype)

    # Fused BatchNorm partial statistics (f32): conv_out is never re-read.
    s1 = jnp.sum(acc, axis=0, keepdims=True)                    # (1, W*Cout)
    s2 = jnp.sum(acc * acc, axis=0, keepdims=True)              # (1, W*Cout)
    stat_ref[...] = jnp.concatenate([s1, s2], axis=0)[None]     # (1, 2, W*Cout)


# ----------------------------------------------------------------------------
# Kernel 2: folded BatchNorm affine + ReLU (f32 VPU math, lane-dense blocks).
# ----------------------------------------------------------------------------
def bn_relu_kernel(y_ref, scale_ref, shift_ref, o_ref):
    # scale/shift were tiled channel->lane once in the wrapper (hoisted), so
    # the kernel only does y*scale + shift and a ReLU in f32.
    y = y_ref[...].astype(jnp.float32)
    z = y * scale_ref[...] + shift_ref[...]
    o_ref[...] = jnp.maximum(z, 0.0).astype(o_ref.dtype)


# ----------------------------------------------------------------------------
# Wrapper
# ----------------------------------------------------------------------------
@functools.partial(jax.jit, static_argnames=("eps",))
def conv_1x3x3_forward(x_ncdhw, weight, bias, gamma, beta, eps=1e-5):
    """weight: (Cout, Cin, 1, 3, 3) as in nn.Conv3d; returns NCDHW output (f32)."""
    N, Cin, D, H, W = x_ncdhw.shape
    Cout = weight.shape[0]
    B = N * D
    WCin, WCout = W * Cin, W * Cout

    # NCDHW -> (N*D, H, W*Cin) channels-last slabs, cast to bf16 in the same
    # fused XLA transpose (halves the dominant input HBM traffic; MXU is bf16).
    x2 = jnp.transpose(x_ncdhw, (0, 2, 3, 4, 1)).reshape(B, H, WCin)
    x2 = x2.astype(jnp.bfloat16)
    w_mat = _block_toeplitz_weights(weight, W).astype(jnp.bfloat16)
    bias_row = jnp.tile(bias.astype(jnp.float32), W).reshape(1, WCout)

    # Batch-tile sizing against the VMEM budget (double-buffered in/out + scratch).
    slab1 = 2 * (H * WCin * 2 + H * WCout * 2) + (H + 2) * WCin * 2
    tb1 = _pick_batch_tile(B, slab1)
    g1 = B // tb1

    conv_out, stats = pl.pallas_call(
        conv_bn_stats_kernel,
        out_shape=(
            jax.ShapeDtypeStruct((B, H, WCout), jnp.bfloat16),
            jax.ShapeDtypeStruct((g1, 2, WCout), jnp.float32),
        ),
        grid=(g1,),
        in_specs=[
            pl.BlockSpec((tb1, H, WCin), lambda i: (i, 0, 0)),
            pl.BlockSpec((3, WCin, WCout), lambda i: (0, 0, 0)),
            pl.BlockSpec((1, WCout), lambda i: (0, 0)),
        ],
        out_specs=(
            pl.BlockSpec((tb1, H, WCout), lambda i: (i, 0, 0)),
            pl.BlockSpec((1, 2, WCout), lambda i: (i, 0, 0)),
        ),
        scratch_shapes=[pltpu.VMEM((tb1, H + 2, WCin), jnp.bfloat16)],
        compiler_params=pltpu.CompilerParams(
            dimension_semantics=("parallel",),
            vmem_limit_bytes=_VMEM_LIMIT_BYTES),
    )(x2, w_mat, bias_row)

    # Tiny cross-tile reduction (g1 x 2 x W*Cout floats) -> folded BN scale/shift.
    s = jnp.sum(stats, axis=0).reshape(2, W, Cout).sum(axis=1)   # (2, Cout)
    count = float(B * H * W)
    mean = s[0] / count
    var = jnp.maximum(s[1] / count - mean * mean, 0.0)           # biased, training-mode BN
    scale = gamma.astype(jnp.float32) / jnp.sqrt(var + eps)
    shift = beta.astype(jnp.float32) - mean * scale
    scale_row = jnp.tile(scale, W).reshape(1, WCout)             # channel->lane tiling, hoisted
    shift_row = jnp.tile(shift, W).reshape(1, WCout)

    slab2 = 2 * (H * WCout * 2 + H * WCout * 4)
    tb2 = _pick_batch_tile(B, slab2)
    g2 = B // tb2

    out = pl.pallas_call(
        bn_relu_kernel,
        out_shape=jax.ShapeDtypeStruct((B, H, WCout), jnp.float32),
        grid=(g2,),
        in_specs=[
            pl.BlockSpec((tb2, H, WCout), lambda i: (i, 0, 0)),
            pl.BlockSpec((1, WCout), lambda i: (0, 0)),
            pl.BlockSpec((1, WCout), lambda i: (0, 0)),
        ],
        out_specs=pl.BlockSpec((tb2, H, WCout), lambda i: (i, 0, 0)),
        compiler_params=pltpu.CompilerParams(
            dimension_semantics=("parallel",),
            vmem_limit_bytes=_VMEM_LIMIT_BYTES),
    )(conv_out, scale_row, shift_row)

    # (N*D, H, W*Cout) -> NCDHW
    out = out.reshape(N, D, H, W, Cout)
    return jnp.transpose(out, (0, 4, 1, 2, 3))


# ----------------------------------------------------------------------------
# References for the self-check.
# ----------------------------------------------------------------------------
def _reference_f32(x, weight, bias, gamma, beta, eps=1e-5):
    """Pure-f32 PyTorch-semantics reference (conv + training-mode BN + ReLU)."""
    y = lax.conv_general_dilated(
        x.astype(jnp.float32), weight.astype(jnp.float32),
        window_strides=(1, 1, 1), padding=((0, 0), (1, 1), (1, 1)),
        dimension_numbers=("NCDHW", "OIDHW", "NCDHW"))
    y = y + bias[None, :, None, None, None]
    mean = jnp.mean(y, axis=(0, 2, 3, 4), keepdims=True)
    var = jnp.mean(jnp.square(y - mean), axis=(0, 2, 3, 4), keepdims=True)
    z = (y - mean) / jnp.sqrt(var + eps)
    z = z * gamma[None, :, None, None, None] + beta[None, :, None, None, None]
    return jnp.maximum(z, 0.0)


def _reference_dtype_matched(x, weight, bias, gamma, beta, eps=1e-5):
    """Same rounding points as the Pallas path: bf16 x/w into an f32-accumulating
    conv, f32 bias + batch stats, bf16 conv intermediate, f32 affine + ReLU."""
    xb = x.astype(jnp.bfloat16).astype(jnp.float32)
    wb = weight.astype(jnp.bfloat16).astype(jnp.float32)
    y = lax.conv_general_dilated(
        xb, wb, window_strides=(1, 1, 1), padding=((0, 0), (1, 1), (1, 1)),
        dimension_numbers=("NCDHW", "OIDHW", "NCDHW"))
    y = y + bias[None, :, None, None, None]
    mean = jnp.mean(y, axis=(0, 2, 3, 4), keepdims=True)
    var = jnp.mean(jnp.square(y - mean), axis=(0, 2, 3, 4), keepdims=True)
    yq = y.astype(jnp.bfloat16).astype(jnp.float32)
    z = (yq - mean) / jnp.sqrt(var + eps)
    z = z * gamma[None, :, None, None, None] + beta[None, :, None, None, None]
    return jnp.maximum(z, 0.0)


if __name__ == "__main__":
    key = jax.random.PRNGKey(0)
    k_x, k_w, k_b, k_g, k_be = jax.random.split(key, 5)

    N, Cin, D, H, W = 2, 4, 3, 16, 16
    Cout = 8                                     # W*Cout = 128 -> lane-dense blocks

    x = jax.random.normal(k_x, (N, Cin, D, H, W), dtype=jnp.float32)
    fan_in = Cin * 1 * 3 * 3
    weight = jax.random.normal(k_w, (Cout, Cin, 1, 3, 3), dtype=jnp.float32) \
        * (1.0 / jnp.sqrt(fan_in))
    bias = 0.1 * jax.random.normal(k_b, (Cout,), dtype=jnp.float32)
    gamma = 1.0 + 0.1 * jax.random.normal(k_g, (Cout,), dtype=jnp.float32)
    beta = 0.1 * jax.random.normal(k_be, (Cout,), dtype=jnp.float32)

    out = jax.block_until_ready(conv_1x3x3_forward(x, weight, bias, gamma, beta))
    assert out.shape == (N, Cout, D, H, W)

    # Tight check against a reference with matching bf16 rounding points.
    ref_m = _reference_dtype_matched(x, weight, bias, gamma, beta)
    assert jnp.allclose(out, ref_m, atol=2e-3, rtol=2e-3), \
        ("max|diff| vs dtype-matched ref:", float(jnp.max(jnp.abs(out - ref_m))))

    # Looser check against the pure-f32 PyTorch-semantics reference (bf16 inputs
    # and intermediate introduce ~1e-2 level differences by construction).
    ref_f = _reference_f32(x, weight, bias, gamma, beta)
    assert jnp.allclose(out, ref_f, atol=3e-2, rtol=3e-2), \
        ("max|diff| vs f32 ref:", float(jnp.max(jnp.abs(out - ref_f))))

    print("KERNEL_OK")
</pallas_src>

<mosaic_0001>
module attributes {stable_mosaic.version = 11 : i64} {
  func.func @conv_bn_stats_kernel(%arg0: i32, %arg1: memref<3x16x64xbf16, #tpu.memory_space<vmem>>, %arg2: memref<3x64x128xbf16, #tpu.memory_space<vmem>>, %arg3: memref<1x128xf32, #tpu.memory_space<vmem>>, %arg4: memref<3x16x128xbf16, #tpu.memory_space<vmem>>, %arg5: memref<1x2x128xf32, #tpu.memory_space<vmem>>, %arg6: memref<3x18x64xbf16, #tpu.memory_space<vmem>>) attributes {dimension_semantics = [#tpu.dimension_semantics<parallel>], iteration_bounds = array<i64: 2>, scalar_prefetch = 0 : i64, scratch_operands = 1 : i64, tpu.core_type = #tpu.core_type<tc>, window_params = [{transform_indices = @transform_0, window_bounds = array<i64: 3, 16, 64>}, {pipeline_mode = #tpu.pipeline_mode<synchronous>, transform_indices = @transform_1, window_bounds = array<i64: 3, 64, 128>}, {pipeline_mode = #tpu.pipeline_mode<synchronous>, transform_indices = @transform_2, window_bounds = array<i64: 1, 128>}, {transform_indices = @transform_3, window_bounds = array<i64: 3, 16, 128>}, {transform_indices = @transform_4, window_bounds = array<i64: 1, 2, 128>}]} {
    %cst = arith.constant 0.000000e+00 : bf16
    %0 = vector.broadcast %cst : bf16 to vector<3x1x64xbf16>
    %c0 = arith.constant 0 : index
    %c0_0 = arith.constant 0 : index
    %c0_1 = arith.constant 0 : index
    %1 = vector.load %arg6[%c0, %c0_0, %c0_1] : memref<3x18x64xbf16, #tpu.memory_space<vmem>>, vector<3x1x64xbf16>
    tpu.vector_store %arg6[%c0, %c0_0, %c0_1], %0 {strides = array<i32>} : memref<3x18x64xbf16, #tpu.memory_space<vmem>>, vector<3x1x64xbf16>,
    %c0_2 = arith.constant 0 : index
    %c17 = arith.constant 17 : index
    %c0_3 = arith.constant 0 : index
    %2 = vector.load %arg6[%c0_2, %c17, %c0_3] : memref<3x18x64xbf16, #tpu.memory_space<vmem>>, vector<3x1x64xbf16>
    tpu.vector_store %arg6[%c0_2, %c17, %c0_3], %0 {strides = array<i32>} : memref<3x18x64xbf16, #tpu.memory_space<vmem>>, vector<3x1x64xbf16>,
    %c0_4 = arith.constant 0 : index
    %c0_5 = arith.constant 0 : index
    %c0_6 = arith.constant 0 : index
    %3 = vector.load %arg1[%c0_4, %c0_5, %c0_6] : memref<3x16x64xbf16, #tpu.memory_space<vmem>>, vector<3x16x64xbf16>
    %c0_7 = arith.constant 0 : index
    %c1 = arith.constant 1 : index
    %c0_8 = arith.constant 0 : index
    %4 = vector.load %arg6[%c0_7, %c1, %c0_8] : memref<3x18x64xbf16, #tpu.memory_space<vmem>>, vector<3x16x64xbf16>
    tpu.vector_store %arg6[%c0_7, %c1, %c0_8], %3 {strides = array<i32>} : memref<3x18x64xbf16, #tpu.memory_space<vmem>>, vector<3x16x64xbf16>,
    %cst_9 = arith.constant 0.000000e+00 : f32
    %5 = vector.broadcast %cst_9 : f32 to vector<48x128xf32>
    %c0_10 = arith.constant 0 : index
    %c0_11 = arith.constant 0 : index
    %c0_12 = arith.constant 0 : index
    %6 = vector.load %arg6[%c0_10, %c0_11, %c0_12] : memref<3x18x64xbf16, #tpu.memory_space<vmem>>, vector<3x16x64xbf16>
    %7 = vector.shape_cast %6 : vector<3x16x64xbf16> to vector<48x64xbf16>
    %c0_13 = arith.constant 0 : index
    %c0_14 = arith.constant 0 : index
    %c0_15 = arith.constant 0 : index
    %8 = vector.load %arg2[%c0_13, %c0_14, %c0_15] : memref<3x64x128xbf16, #tpu.memory_space<vmem>>, vector<1x64x128xbf16>
    %9 = vector.shape_cast %8 : vector<1x64x128xbf16> to vector<64x128xbf16>
    %cst_16 = arith.constant dense<0.000000e+00> : vector<48x128xf32>
    %10 = tpu.matmul %7, %9, %cst_16 {dimension_numbers = #tpu.dot_dimension_numbers<[1], [0], [0], [1], [0, 0, 1, 1], [], []>} : vector<48x64xbf16>, vector<64x128xbf16>, vector<48x128xf32> -> vector<48x128xf32>
    %11 = arith.addf %5, %10 : vector<48x128xf32>
    %c0_17 = arith.constant 0 : index
    %c1_18 = arith.constant 1 : index
    %c0_19 = arith.constant 0 : index
    %12 = vector.load %arg6[%c0_17, %c1_18, %c0_19] : memref<3x18x64xbf16, #tpu.memory_space<vmem>>, vector<3x16x64xbf16>
    %13 = vector.shape_cast %12 : vector<3x16x64xbf16> to vector<48x64xbf16>
    %c1_20 = arith.constant 1 : index
    %c0_21 = arith.constant 0 : index
    %c0_22 = arith.constant 0 : index
    %14 = vector.load %arg2[%c1_20, %c0_21, %c0_22] : memref<3x64x128xbf16, #tpu.memory_space<vmem>>, vector<1x64x128xbf16>
    %15 = vector.shape_cast %14 : vector<1x64x128xbf16> to vector<64x128xbf16>
    %cst_23 = arith.constant dense<0.000000e+00> : vector<48x128xf32>
    %16 = tpu.matmul %13, %15, %cst_23 {dimension_numbers = #tpu.dot_dimension_numbers<[1], [0], [0], [1], [0, 0, 1, 1], [], []>} : vector<48x64xbf16>, vector<64x128xbf16>, vector<48x128xf32> -> vector<48x128xf32>
    %17 = arith.addf %11, %16 : vector<48x128xf32>
    %c0_24 = arith.constant 0 : index
    %c2 = arith.constant 2 : index
    %c0_25 = arith.constant 0 : index
    %18 = vector.load %arg6[%c0_24, %c2, %c0_25] : memref<3x18x64xbf16, #tpu.memory_space<vmem>>, vector<3x16x64xbf16>
    %19 = vector.shape_cast %18 : vector<3x16x64xbf16> to vector<48x64xbf16>
    %c2_26 = arith.constant 2 : index
    %c0_27 = arith.constant 0 : index
    %c0_28 = arith.constant 0 : index
    %20 = vector.load %arg2[%c2_26, %c0_27, %c0_28] : memref<3x64x128xbf16, #tpu.memory_space<vmem>>, vector<1x64x128xbf16>
    %21 = vector.shape_cast %20 : vector<1x64x128xbf16> to vector<64x128xbf16>
    %cst_29 = arith.constant dense<0.000000e+00> : vector<48x128xf32>
    %22 = tpu.matmul %19, %21, %cst_29 {dimension_numbers = #tpu.dot_dimension_numbers<[1], [0], [0], [1], [0, 0, 1, 1], [], []>} : vector<48x64xbf16>, vector<64x128xbf16>, vector<48x128xf32> -> vector<48x128xf32>
    %23 = arith.addf %17, %22 : vector<48x128xf32>
    %c0_30 = arith.constant 0 : index
    %c0_31 = arith.constant 0 : index
    %24 = vector.load %arg3[%c0_30, %c0_31] : memref<1x128xf32, #tpu.memory_space<vmem>>, vector<1x128xf32>
    %25 = vector.broadcast %24 : vector<1x128xf32> to vector<48x128xf32>
    %26 = arith.addf %23, %25 : vector<48x128xf32>
    %27 = vector.shape_cast %26 : vector<48x128xf32> to vector<3x16x128xf32>
    %28 = arith.truncf %27 : vector<3x16x128xf32> to vector<3x16x128xbf16>
    %c0_32 = arith.constant 0 : index
    %c0_33 = arith.constant 0 : index
    %c0_34 = arith.constant 0 : index
    %29 = vector.load %arg4[%c0_32, %c0_33, %c0_34] : memref<3x16x128xbf16, #tpu.memory_space<vmem>>, vector<3x16x128xbf16>
    tpu.vector_store %arg4[%c0_32, %c0_33, %c0_34], %28 {strides = array<i32>} : memref<3x16x128xbf16, #tpu.memory_space<vmem>>, vector<3x16x128xbf16>,
    %cst_35 = arith.constant dense<0.000000e+00> : vector<128xf32>
    %30 = vector.multi_reduction <add>, %26, %cst_35 [0] : vector<48x128xf32> to vector<128xf32>
    %31 = vector.shape_cast %30 : vector<128xf32> to vector<1x128xf32>
    %32 = arith.mulf %26, %26 : vector<48x128xf32>
    %cst_36 = arith.constant dense<0.000000e+00> : vector<128xf32>
    %33 = vector.multi_reduction <add>, %32, %cst_36 [0] : vector<48x128xf32> to vector<128xf32>
    %34 = vector.shape_cast %33 : vector<128xf32> to vector<1x128xf32>
    %35 = tpu.concatenate %31, %34 in 0 : vector<1x128xf32>, vector<1x128xf32> -> vector<2x128xf32>
    %36 = vector.shape_cast %35 : vector<2x128xf32> to vector<1x2x128xf32>
    %c0_37 = arith.constant 0 : index
    %c0_38 = arith.constant 0 : index
    %c0_39 = arith.constant 0 : index
    %37 = vector.load %arg5[%c0_37, %c0_38, %c0_39] : memref<1x2x128xf32, #tpu.memory_space<vmem>>, vector<1x2x128xf32>
    tpu.vector_store %arg5[%c0_37, %c0_38, %c0_39], %36 {strides = array<i32>} : memref<1x2x128xf32, #tpu.memory_space<vmem>>, vector<1x2x128xf32>,
    return
  }
  func.func @transform_0(%arg0: i32) -> (i32, i32, i32) {
    %c0_i32 = arith.constant 0 : i32
    %c0_i32_0 = arith.constant 0 : i32
    %c0_i32_1 = arith.constant 0 : i32
    return %arg0, %c0_i32, %c0_i32_0 : i32, i32, i32
  }
  func.func @transform_1(%arg0: i32) -> (i32, i32, i32) {
    %c0_i32 = arith.constant 0 : i32
    %c0_i32_0 = arith.constant 0 : i32
    %c0_i32_1 = arith.constant 0 : i32
    %c0_i32_2 = arith.constant 0 : i32
    return %c0_i32, %c0_i32_0, %c0_i32_1 : i32, i32, i32
  }
  func.func @transform_2(%arg0: i32) -> (i32, i32) {
    %c0_i32 = arith.constant 0 : i32
    %c0_i32_0 = arith.constant 0 : i32
    %c0_i32_1 = arith.constant 0 : i32
    return %c0_i32, %c0_i32_0 : i32, i32
  }
  func.func @transform_3(%arg0: i32) -> (i32, i32, i32) {
    %c0_i32 = arith.constant 0 : i32
    %c0_i32_0 = arith.constant 0 : i32
    %c0_i32_1 = arith.constant 0 : i32
    return %arg0, %c0_i32, %c0_i32_0 : i32, i32, i32
  }
  func.func @transform_4(%arg0: i32) -> (i32, i32, i32) {
    %c0_i32 = arith.constant 0 : i32
    %c0_i32_0 = arith.constant 0 : i32
    %c0_i32_1 = arith.constant 0 : i32
    return %arg0, %c0_i32, %c0_i32_0 : i32, i32, i32
  }
}

module attributes {stable_mosaic.version = 11 : i64} {
  func.func @bn_relu_kernel(%arg0: i32, %arg1: memref<3x16x128xbf16, #tpu.memory_space<vmem>>, %arg2: memref<1x128xf32, #tpu.memory_space<vmem>>, %arg3: memref<1x128xf32, #tpu.memory_space<vmem>>, %arg4: memref<3x16x128xf32, #tpu.memory_space<vmem>>) attributes {dimension_semantics = [#tpu.dimension_semantics<parallel>], iteration_bounds = array<i64: 2>, scalar_prefetch = 0 : i64, scratch_operands = 0 : i64, tpu.core_type = #tpu.core_type<tc>, window_params = [{transform_indices = @transform_0, window_bounds = array<i64: 3, 16, 128>}, {pipeline_mode = #tpu.pipeline_mode<synchronous>, transform_indices = @transform_1, window_bounds = array<i64: 1, 128>}, {pipeline_mode = #tpu.pipeline_mode<synchronous>, transform_indices = @transform_2, window_bounds = array<i64: 1, 128>}, {transform_indices = @transform_3, window_bounds = array<i64: 3, 16, 128>}]} {
    %c0 = arith.constant 0 : index
    %c0_0 = arith.constant 0 : index
    %c0_1 = arith.constant 0 : index
    %0 = vector.load %arg1[%c0, %c0_0, %c0_1] : memref<3x16x128xbf16, #tpu.memory_space<vmem>>, vector<3x16x128xbf16>
    %1 = arith.extf %0 : vector<3x16x128xbf16> to vector<3x16x128xf32>
    %c0_2 = arith.constant 0 : index
    %c0_3 = arith.constant 0 : index
    %2 = vector.load %arg2[%c0_2, %c0_3] : memref<1x128xf32, #tpu.memory_space<vmem>>, vector<1x128xf32>
    %3 = vector.shape_cast %2 : vector<1x128xf32> to vector<1x1x128xf32>
    %4 = vector.broadcast %3 : vector<1x1x128xf32> to vector<3x16x128xf32>
    %5 = arith.mulf %1, %4 : vector<3x16x128xf32>
    %c0_4 = arith.constant 0 : index
    %c0_5 = arith.constant 0 : index
    %6 = vector.load %arg3[%c0_4, %c0_5] : memref<1x128xf32, #tpu.memory_space<vmem>>, vector<1x128xf32>
    %7 = vector.shape_cast %6 : vector<1x128xf32> to vector<1x1x128xf32>
    %8 = vector.broadcast %7 : vector<1x1x128xf32> to vector<3x16x128xf32>
    %9 = arith.addf %5, %8 : vector<3x16x128xf32>
    %cst = arith.constant 0.000000e+00 : f32
    %10 = vector.broadcast %cst : f32 to vector<3x16x128xf32>
    %11 = arith.maximumf %9, %10 : vector<3x16x128xf32>
    %c0_6 = arith.constant 0 : index
    %c0_7 = arith.constant 0 : index
    %c0_8 = arith.constant 0 : index
    %12 = vector.load %arg4[%c0_6, %c0_7, %c0_8] : memref<3x16x128xf32, #tpu.memory_space<vmem>>, vector<3x16x128xf32>
    tpu.vector_store %arg4[%c0_6, %c0_7, %c0_8], %11 {strides = array<i32>} : memref<3x16x128xf32, #tpu.memory_space<vmem>>, vector<3x16x128xf32>,
    return
  }
  func.func @transform_0(%arg0: i32) -> (i32, i32, i32) {
    %c0_i32 = arith.constant 0 : i32
    %c0_i32_0 = arith.constant 0 : i32
    %c0_i32_1 = arith.constant 0 : i32
    return %arg0, %c0_i32, %c0_i32_0 : i32, i32, i32
  }
  func.func @transform_1(%arg0: i32) -> (i32, i32) {
    %c0_i32 = arith.constant 0 : i32
    %c0_i32_0 = arith.constant 0 : i32
    %c0_i32_1 = arith.constant 0 : i32
    return %c0_i32, %c0_i32_0 : i32, i32
  }
  func.func @transform_2(%arg0: i32) -> (i32, i32) {
    %c0_i32 = arith.constant 0 : i32
    %c0_i32_0 = arith.constant 0 : i32
    %c0_i32_1 = arith.constant 0 : i32
    return %c0_i32, %c0_i32_0 : i32, i32
  }
  func.func @transform_3(%arg0: i32) -> (i32, i32, i32) {
    %c0_i32 = arith.constant 0 : i32
    %c0_i32_0 = arith.constant 0 : i32
    %c0_i32_1 = arith.constant 0 : i32
    return %arg0, %c0_i32, %c0_i32_0 : i32, i32, i32
  }
}

</mosaic_0001>

<llo_original>
// kernel: tile.18
$region0: #{tile.18}
  #allocation0 [shape = 's32[1]{0}', space=sflag, size = 0x4, scoped, tag = 'scoped memory for tile.18']
  %s0 = inlined_call_operand.vmem [shape: f32[8], index: 0, kind: input, shape index: {}]
  %s1 = inlined_call_operand.vmem [shape: f32[16,8], index: 1, kind: output, shape index: {}]
  // Predicated region
  $region2: #{tile.18} parent=0 // pred_check
    _
  $region3: #{tile.18} parent=0 // pred_check_branch
    %3 = sbr.rel (0) target = $region5
  $region4: #{tile.18} parent=0 // pred_region
    _
  $region5: #{tile.18} parent=0 // pred_fallthru
    _
  %v4 = vld [vmem:[%s0] ss:$0 sm:$0xff]
  %5 = vst [vmem:[%s1] sm:$0xff] %v4
  %s6 = scalar_lea.vmem %s1, 8
  %7 = vst [vmem:[%s6] sm:$0xff] %v4

// kernel: tile.19
$region0: #{tile.19}
  %s0 = inlined_call_operand.vmem [shape: f32[16,8], index: 0, kind: input, shape index: {}]
  %s1 = inlined_call_operand.vmem [shape: f32[1,128], index: 1, kind: output, shape index: {}]
  $region1: #{tile.19} parent=0
    #allocation0 [shape = 'u8[4096]{0}', space=vmem, size = 0x1000, scoped, tag = 'scoped mem for output reshape']
    %v2 = vld [vmem:[%s0] sm:$0x1]
    %vm3 = vcmask 64512
    %4 = vst.msk [vmem:[#allocation0] sm:$0x1] %vm3, %v2
    %s5 = scalar_lea.vmem %s0, 15
    %v6 = vld [vmem:[%s5] sm:$0x1]
    %7 = vrot.lane.b32.xlu0 %v6, 120
    %v8 = vpop.permute.xlu0 %7
    %vm9 = vcmask 1048512
    %10 = vst.msk [vmem:[#allocation0] sm:$0x1] %vm9, %v8
    %s11 = scalar_lea.vmem %s0, 14
    %v12 = vld [vmem:[%s11] sm:$0x1]
    %13 = vrot.lane.b32.xlu0 %v12, 112
    %v14 = vpop.permute.xlu0 %13
    %vm15 = vcmask 982912
    %16 = vst.msk [vmem:[#allocation0] sm:$0x1] %vm15, %v14
    %s17 = scalar_lea.vmem %s0, 13
    %v18 = vld [vmem:[%s17] sm:$0x1]
    %19 = vrot.lane.b32.xlu0 %v18, 104
    %v20 = vpop.permute.xlu0 %19
    %vm21 = vcmask 917312
    %22 = vst.msk [vmem:[#allocation0] sm:$0x1] %vm21, %v20
    %s23 = scalar_lea.vmem %s0, 12
    %v24 = vld [vmem:[%s23] sm:$0x1]
    %25 = vrot.lane.b32.xlu0 %v24, 96
    %v26 = vpop.permute.xlu0 %25
    %vm27 = vcmask 851712
    %28 = vst.msk [vmem:[#allocation0] sm:$0x1] %vm27, %v26
    %s29 = scalar_lea.vmem %s0, 11
    %v30 = vld [vmem:[%s29] sm:$0x1]
    %31 = vrot.lane.b32.xlu0 %v30, 88
    %v32 = vpop.permute.xlu0 %31
    %vm33 = vcmask 786112
    %34 = vst.msk [vmem:[#allocation0] sm:$0x1] %vm33, %v32
    %s35 = scalar_lea.vmem %s0, 10
    %v36 = vld [vmem:[%s35] sm:$0x1]
    %37 = vrot.lane.b32.xlu0 %v36, 80
    %v38 = vpop.permute.xlu0 %37
    %vm39 = vcmask 720512
    %40 = vst.msk [vmem:[#allocation0] sm:$0x1] %vm39, %v38
    %s41 = scalar_lea.vmem %s0, 9
    %v42 = vld [vmem:[%s41] sm:$0x1]
    %43 = vrot.lane.b32.xlu0 %v42, 72
    %v44 = vpop.permute.xlu0 %43
    %vm45 = vcmask 654912
    %46 = vst.msk [vmem:[#allocation0] sm:$0x1] %vm45, %v44
    %s47 = scalar_lea.vmem %s0, 8
    %v48 = vld [vmem:[%s47] sm:$0x1]
    %49 = vrot.lane.b32.xlu0 %v48, 64
    %v50 = vpop.permute.xlu0 %49
    %vm51 = vcmask 589312
    %52 = vst.msk [vmem:[#allocation0] sm:$0x1] %vm51, %v50
    %s53 = scalar_lea.vmem %s0, 7
    %v54 = vld [vmem:[%s53] sm:$0x1]
    %55 = vrot.lane.b32.xlu0 %v54, 56
    %v56 = vpop.permute.xlu0 %55
    %vm57 = vcmask 523712
    %58 = vst.msk [vmem:[#allocation0] sm:$0x1] %vm57, %v56
    %s59 = scalar_lea.vmem %s0, 6
    %v60 = vld [vmem:[%s59] sm:$0x1]
    %61 = vrot.lane.b32.xlu0 %v60, 48
    %v62 = vpop.permute.xlu0 %61
    %vm63 = vcmask 458112
    %64 = vst.msk [vmem:[#allocation0] sm:$0x1] %vm63, %v62
    %s65 = scalar_lea.vmem %s0, 5
    %v66 = vld [vmem:[%s65] sm:$0x1]
    %67 = vrot.lane.b32.xlu0 %v66, 40
    %v68 = vpop.permute.xlu0 %67
    %vm69 = vcmask 392512
    %70 = vst.msk [vmem:[#allocation0] sm:$0x1] %vm69, %v68
    %s71 = scalar_lea.vmem %s0, 4
    %v72 = vld [vmem:[%s71] sm:$0x1]
    %73 = vrot.lane.b32.xlu0 %v72, 32
    %v74 = vpop.permute.xlu0 %73
    %vm75 = vcmask 326912
    %76 = vst.msk [vmem:[#allocation0] sm:$0x1] %vm75, %v74
    %s77 = scalar_lea.vmem %s0, 3
    %v78 = vld [vmem:[%s77] sm:$0x1]
    %79 = vrot.lane.b32.xlu0 %v78, 24
    %v80 = vpop.permute.xlu0 %79
    %vm81 = vcmask 261312
    %82 = vst.msk [vmem:[#allocation0] sm:$0x1] %vm81, %v80
    %s83 = scalar_lea.vmem %s0, 2
    %v84 = vld [vmem:[%s83] sm:$0x1]
    %85 = vrot.lane.b32.xlu0 %v84, 16
    %v86 = vpop.permute.xlu0 %85
    %vm87 = vcmask 195712
    %88 = vst.msk [vmem:[#allocation0] sm:$0x1] %vm87, %v86
    %s89 = scalar_lea.vmem %s0, 1
    %v90 = vld [vmem:[%s89] sm:$0x1]
    %91 = vrot.lane.b32.xlu0 %v90, 8
    %v92 = vpop.permute.xlu0 %91
    %vm93 = vcmask 130112
    %94 = vst.msk [vmem:[#allocation0] sm:$0x1] %vm93, %v92
    %s96 = sshllo.u32 0, 1
    %v98 = vld [vmem:[#allocation0] sm:%s96]
    %s99 = sshllo.u32 0, 1
    %100 = vst [vmem:[%s1] sm:%s99] %v98

// kernel: conv_1x3x3_forward.3
$region0: #{conv_1x3x3_forward.3}
  #allocation0 [shape = 'u32[]', space=smem, size = 0x4, offset = 0x4, fixed_abs, tag = 'smem constant byte address 0x4 - core index']
  #allocation1 [shape = 'u32[144,128]{1,0:T(1,128)}', space=vmem, size = 0x12000, scoped, tag = 'internal scratch']
  %s0 = inlined_call_operand.vmem [shape: bf16[6,16,128], index: 0, kind: input, shape index: {}]
  %s1 = inlined_call_operand.vmem [shape: f32[1,128], index: 1, kind: input, shape index: {}]
  %s2 = inlined_call_operand.vmem [shape: f32[1,128], index: 2, kind: input, shape index: {}]
  %s3 = inlined_call_operand.vmem [shape: f32[6,16,128], index: 3, kind: output, shape index: {}]
  %s4 = sld [smem:[#allocation0]]
  $region45: #{conv_1x3x3_forward.3} parent=0
    _
  %s6 = ssub.s32 1, %s4
  %s7 = scalar_select 0, %s6, %s4
  loop: start=0, step=1, limit=4
  $region2: #{conv_1x3x3_forward.3} parent=0 // loop_pre_header
    _
  $region3: #{conv_1x3x3_forward.3} parent=0 // loop_header
    %s9 = sphi 0, %s13
    %p10 = scmp.ge.s32.totalorder %s9, 4
    %s19 = sphi 0, %s21
    %s22 = sphi 0, %s19
    %s23 = sphi 0, %s22
    %s39 = sphi 0, %s23
    %s43 = sphi 0, %s43
    %s45 = sphi 0, %s43
    %s46 = sphi 0, %s45
    %s60 = sphi 0, %s46
    %s64 = sphi 0, %s64
    %s66 = sphi 0, %s64
    %s67 = sphi 0, %s66
    %s81 = sphi 0, %s67
    %s87 = sphi 0, %s89
    %s90 = sphi 0, %s87
    %s91 = sphi 0, %s90
    %s107 = sphi 0, %s91
  $region4: #{conv_1x3x3_forward.3} parent=0 // loop_header_branch
    %12 = sbr.rel (%p10) target = $region8
  $region5: #{conv_1x3x3_forward.3} parent=0 // loop_body
    %s14 = ssub.s32 %s9, 1
    %s15 = ssub.s32 %s9, 2
    %s16 = sadd.s32 %s9, 1
    %s17 = ssub.s32 %s9, %s16
    %p18 = scmp.eq.s32.totalorder %s17, 0
    %s20 = sadd.s32 %s19, 1
    %s21 = scalar_select %p18, %s19, %s20
    %p24 = pneg %p18
    %p25 = scmp.eq.s32.totalorder %s9, 1
    %p26 = por %p24, %p25
    %p27 = scmp.ne.s32.totalorder %s19, %s22
    %p28 = scmp.eq.s32.totalorder %s9, 0
    %p29 = por %p27, %p28
    %p30 = scmp.ne.s32.totalorder %s19, %s22
    %p31 = scmp.eq.s32.totalorder %s14, 1
    %p32 = por %p30, %p31
    %p33 = scmp.ne.s32.totalorder %s22, %s23
    %p34 = scmp.eq.s32.totalorder %s14, 0
    %p35 = por %p33, %p34
    %p36 = scmp.ne.s32.totalorder %s22, %s23
    %p37 = scmp.eq.s32.totalorder %s15, 1
    %p38 = por %p36, %p37
    %p40 = scmp.ne.s32.totalorder %s23, %s39
    %p41 = scmp.eq.s32.totalorder %s15, 0
    %p42 = por %p40, %p41
    %s44 = sadd.s32 %s43, 1
    %p47 = scmp.eq.s32.totalorder %s9, 1
    %p48 = scmp.ne.s32.totalorder %s43, %s45
    %p49 = scmp.eq.s32.totalorder %s9, 0
    %p50 = por %p48, %p49
    %p51 = scmp.ne.s32.totalorder %s43, %s45
    %p52 = scmp.eq.s32.totalorder %s14, 1
    %p53 = por %p51, %p52
    %p54 = scmp.ne.s32.totalorder %s45, %s46
    %p55 = scmp.eq.s32.totalorder %s14, 0
    %p56 = por %p54, %p55
    %p57 = scmp.ne.s32.totalorder %s45, %s46
    %p58 = scmp.eq.s32.totalorder %s15, 1
    %p59 = por %p57, %p58
    %p61 = scmp.ne.s32.totalorder %s46, %s60
    %p62 = scmp.eq.s32.totalorder %s15, 0
    %p63 = por %p61, %p62
    %s65 = sadd.s32 %s64, 1
    %p68 = scmp.eq.s32.totalorder %s9, 1
    %p69 = scmp.ne.s32.totalorder %s64, %s66
    %p70 = scmp.eq.s32.totalorder %s9, 0
    %p71 = por %p69, %p70
    %p72 = scmp.ne.s32.totalorder %s64, %s66
    %p73 = scmp.eq.s32.totalorder %s14, 1
    %p74 = por %p72, %p73
    %p75 = scmp.ne.s32.totalorder %s66, %s67
    %p76 = scmp.eq.s32.totalorder %s14, 0
    %p77 = por %p75, %p76
    %p78 = scmp.ne.s32.totalorder %s66, %s67
    %p79 = scmp.eq.s32.totalorder %s15, 1
    %p80 = por %p78, %p79
    %p82 = scmp.ne.s32.totalorder %s67, %s81
    %p83 = scmp.eq.s32.totalorder %s15, 0
    %p84 = por %p82, %p83
    %s85 = ssub.s32 %s9, %s16
    %p86 = scmp.eq.s32.totalorder %s85, 0
    %s88 = sadd.s32 %s87, 1
    %s89 = scalar_select %p86, %s87, %s88
    %p92 = pneg %p86
    %p93 = scmp.eq.s32.totalorder %s9, 1
    %p94 = por %p92, %p93
    %p95 = scmp.ne.s32.totalorder %s87, %s90
    %p96 = scmp.eq.s32.totalorder %s9, 0
    %p97 = por %p95, %p96
    %p98 = scmp.ne.s32.totalorder %s87, %s90
    %p99 = scmp.eq.s32.totalorder %s14, 1
    %p100 = por %p98, %p99
    %p101 = scmp.ne.s32.totalorder %s90, %s91
    %p102 = scmp.eq.s32.totalorder %s14, 0
    %p103 = por %p101, %p102
    %p104 = scmp.ne.s32.totalorder %s90, %s91
    %p105 = scmp.eq.s32.totalorder %s15, 1
    %p106 = por %p104, %p105
    %p108 = scmp.ne.s32.totalorder %s91, %s107
    %p109 = scmp.eq.s32.totalorder %s15, 0
    %p110 = por %p108, %p109
    %p111 = scmp.le.s32.totalorder 1, %s9
    %p112 = scmp.lt.s32.totalorder %s9, 3
    %p113 = pnand %p111, %p112
    %p114 = pneg %p113
    // Predicated region
    $region9: #{conv_1x3x3_forward.3} parent=5 // pred_check
      _
    $region10: #{conv_1x3x3_forward.3} parent=5 // pred_check_branch
      %116 = sbr.rel (%p113) target = $region12
    $region11: #{conv_1x3x3_forward.3} parent=5 // pred_region
      %s117 = ssub.s32 %s9, 1
      // Predicated region
      $region13: #{conv_1x3x3_forward.3} parent=11 // pred_check
        %p118 = pneg %p56
      $region14: #{conv_1x3x3_forward.3} parent=11 // pred_check_branch
        %120 = sbr.rel (%p118) target = $region16
      $region15: #{conv_1x3x3_forward.3} parent=11 // pred_region
        _
      $region16: #{conv_1x3x3_forward.3} parent=11 // pred_fallthru
        _
      // Predicated region
      $region17: #{conv_1x3x3_forward.3} parent=11 // pred_check
        %p121 = pneg %p77
      $region18: #{conv_1x3x3_forward.3} parent=11 // pred_check_branch
        %123 = sbr.rel (%p121) target = $region20
      $region19: #{conv_1x3x3_forward.3} parent=11 // pred_region
        _
      $region20: #{conv_1x3x3_forward.3} parent=11 // pred_fallthru
        _
    $region12: #{conv_1x3x3_forward.3} parent=5 // pred_fallthru
      _
    %p124 = scmp.lt.s32.totalorder %s9, 2
    // Predicated region
    $region21: #{conv_1x3x3_forward.3} parent=5 // pred_check
      %p125 = pneg %p124
    $region22: #{conv_1x3x3_forward.3} parent=5 // pred_check_branch
      %127 = sbr.rel (%p125) target = $region24
    $region23: #{conv_1x3x3_forward.3} parent=5 // pred_region
      // Predicated region
      $region25: #{conv_1x3x3_forward.3} parent=23 // pred_check
        %p128 = pneg %p29
      $region26: #{conv_1x3x3_forward.3} parent=23 // pred_check_branch
        %130 = sbr.rel (%p128) target = $region28
      $region27: #{conv_1x3x3_forward.3} parent=23 // pred_region
        %s131 = smul.u32 3, %s9
        %p132 = scmp.lt.s32.totalorder %s131, 5
        %s133 = scalar_select %p132, %s131, 5
        %s134 = smul.addr %s133, 2
        %s135 = smul.addr %s134, 4
        %s136 = scalar_lea.vmem %s0, %s135
        %s137 = smul.u32 3, %s9
      $region28: #{conv_1x3x3_forward.3} parent=23 // pred_fallthru
        _
    $region24: #{conv_1x3x3_forward.3} parent=5 // pred_fallthru
      _
    %p138 = scmp.le.s32.totalorder 1, %s9
    %p139 = scmp.lt.s32.totalorder %s9, 3
    %p140 = pnand %p138, %p139
    %p141 = pneg %p140
    // Predicated region
    $region29: #{conv_1x3x3_forward.3} parent=5 // pred_check
      _
    $region30: #{conv_1x3x3_forward.3} parent=5 // pred_check_branch
      %143 = sbr.rel (%p140) target = $region32
    $region31: #{conv_1x3x3_forward.3} parent=5 // pred_region
      %s144 = ssub.s32 %s9, 1
      %s145 = smul.u32 3, %s14
      %p146 = scmp.lt.s32.totalorder %s145, 5
      %s147 = scalar_select %p146, %s145, 5
      %s148 = smul.addr %s147, 2
      %s149 = smul.addr %s148, 4
      %s150 = scalar_lea.vmem %s0, %s149
      %p151 = pneg %p35
      %p152 = pneg %p32
      %p153 = pneg %p56
      %p154 = pneg %p53
      %p155 = pneg %p77
      %p156 = pneg %p74
      %p157 = pneg %p103
      %p158 = pneg %p100
      %s159 = smul.u32 3, %s14
      %p160 = scmp.lt.s32.totalorder %s159, 5
      %s161 = scalar_select %p160, %s159, 5
      %s162 = smul.addr %s161, 2
      %s163 = smul.addr %s162, 8
      %s164 = scalar_lea.vmem %s3, %s163
      %s165 = smul.u32 3, %s14
      %p166 = scmp.lt.s32.totalorder %s165, 5
      %s167 = scalar_select %p166, %s165, 5
      %s168 = smul.addr %s167, 2
      %s169 = smul.addr %s168, 4
      %s170 = scalar_lea.vmem %s0, %s169
      %s171 = smul.u32 3, %s14
      %s172 = smul.u32 3, %s14
      %p173 = scmp.lt.s32.totalorder %s172, 5
      %s174 = scalar_select %p173, %s172, 5
      %s175 = smul.addr %s174, 2
      %s176 = smul.addr %s175, 8
      %s177 = scalar_lea.vmem %s3, %s176
      %s178 = smul.u32 3, %s14
      %v179 = vld [vmem:[%s170] sm:$0xf]
      %v180 = vld [vmem:[%s170 + $0x4] sm:$0xf]
      %v181 = vld [vmem:[%s170 + $0x8] sm:$0xf]
      %v182 = vld [vmem:[%s170 + $0xc] sm:$0xf]
      %v183 = vld [vmem:[%s170 + $0x10] sm:$0xf]
      %v184 = vld [vmem:[%s170 + $0x14] sm:$0xf]
      %v185 = vunpack.c.l.bf16 %v179
      %v186 = vunpack.c.l.bf16 %v180
      %v187 = vunpack.c.l.bf16 %v181
      %v188 = vunpack.c.l.bf16 %v182
      %v189 = vunpack.c.l.bf16 %v183
      %v190 = vunpack.c.l.bf16 %v184
      %v191 = vld [vmem:[%s1] sm:$0x1]
      %v193 = vlaneseq
      %v194 = vshrl.u32 %v193, 7
      %v195 = vsub.s32 0, %v194
      %v196 = vrot.slane %v191, %v195
      %v198 = vmul.f32 %v185, %v196
      %v199 = vmul.f32 %v186, %v196
      %v200 = vmul.f32 %v187, %v196
      %v201 = vmul.f32 %v188, %v196
      %v202 = vmul.f32 %v189, %v196
      %v203 = vmul.f32 %v190, %v196
      %v204 = vld [vmem:[%s2] sm:$0x1]
      %v206 = vlaneseq
      %v207 = vshrl.u32 %v206, 7
      %v208 = vsub.s32 0, %v207
      %v209 = vrot.slane %v204, %v208
      %v211 = vadd.f32 %v198, %v209
      %v212 = vadd.f32 %v199, %v209
      %v213 = vadd.f32 %v200, %v209
      %v214 = vadd.f32 %v201, %v209
      %v215 = vadd.f32 %v202, %v209
      %v216 = vadd.f32 %v203, %v209
      %v217 = vmax.f32 %v211, 0.0
      %v218 = vmax.f32 %v212, 0.0
      %v219 = vmax.f32 %v213, 0.0
      %v220 = vmax.f32 %v214, 0.0
      %v221 = vmax.f32 %v215, 0.0
      %v222 = vmax.f32 %v216, 0.0
      %223 = vst [vmem:[%s177] sm:$0xff] %v217
      %224 = vst [vmem:[%s177 + $0x8] sm:$0xff] %v218
      %225 = vst [vmem:[%s177 + $0x10] sm:$0xff] %v219
      %226 = vst [vmem:[%s177 + $0x18] sm:$0xff] %v220
      %227 = vst [vmem:[%s177 + $0x20] sm:$0xff] %v221
      %228 = vst [vmem:[%s177 + $0x28] sm:$0xff] %v222
      %s229 = smul.u32 3, %s14
      %p230 = scmp.lt.s32.totalorder %s229, 5
      %s231 = scalar_select %p230, %s229, 5
      %s232 = smul.addr %s231, 2
      %s233 = smul.addr %s232, 8
      %s234 = scalar_lea.vmem %s3, %s233
      // Predicated region
      $region33: #{conv_1x3x3_forward.3} parent=31 // pred_check
        %p235 = pneg %p100
      $region34: #{conv_1x3x3_forward.3} parent=31 // pred_check_branch
        %237 = sbr.rel (%p235) target = $region36
      $region35: #{conv_1x3x3_forward.3} parent=31 // pred_region
        %s238 = smul.u32 3, %s14
      $region36: #{conv_1x3x3_forward.3} parent=31 // pred_fallthru
        _
    $region32: #{conv_1x3x3_forward.3} parent=5 // pred_fallthru
      _
    %p239 = scmp.le.s32.totalorder 2, %s9
    // Predicated region
    $region37: #{conv_1x3x3_forward.3} parent=5 // pred_check
      %p240 = pneg %p239
    $region38: #{conv_1x3x3_forward.3} parent=5 // pred_check_branch
      %242 = sbr.rel (%p240) target = $region40
    $region39: #{conv_1x3x3_forward.3} parent=5 // pred_region
      %s243 = ssub.s32 %s9, 2
      // Predicated region
      $region41: #{conv_1x3x3_forward.3} parent=39 // pred_check
        %p244 = pneg %p106
      $region42: #{conv_1x3x3_forward.3} parent=39 // pred_check_branch
        %246 = sbr.rel (%p244) target = $region44
      $region43: #{conv_1x3x3_forward.3} parent=39 // pred_region
        %s247 = smul.u32 3, %s15
        %p248 = scmp.lt.s32.totalorder %s247, 5
        %s249 = scalar_select %p248, %s247, 5
        %s250 = smul.addr %s249, 2
        %s251 = smul.addr %s250, 8
        %s252 = scalar_lea.vmem %s3, %s251
      $region44: #{conv_1x3x3_forward.3} parent=39 // pred_fallthru
        _
    $region40: #{conv_1x3x3_forward.3} parent=5 // pred_fallthru
      _
  $region6: #{conv_1x3x3_forward.3} parent=0 // loop_footer
    %s13 = sadd.s32 1, %s9
  $region7: #{conv_1x3x3_forward.3} parent=0 // loop_footer_branch
    %8 = sbr.rel target = $region3
  $region8: #{conv_1x3x3_forward.3} parent=0 // loop_exit
    _

// kernel: conv_1x3x3_forward.2
$region0: #{conv_1x3x3_forward.2}
  #allocation0 [shape = 'u32[]', space=smem, size = 0x4, offset = 0x4, fixed_abs, tag = 'smem constant byte address 0x4 - core index']
  #allocation1 [shape = 'u32[144,128]{1,0:T(1,128)}', space=vmem, size = 0x12000, scoped, tag = 'internal scratch']
  #allocation2 [shape = 'bf16[3,18,64]{2,1,0:T(8,128)(2,1)}', space=vmem, size = 0x4800, scoped, tag = 'scratch operand']
  %s0 = inlined_call_operand.vmem [shape: bf16[6,16,64], index: 0, kind: input, shape index: {}]
  %s1 = inlined_call_operand.vmem [shape: bf16[3,64,128], index: 1, kind: input, shape index: {}]
  %s2 = inlined_call_operand.vmem [shape: f32[1,128], index: 2, kind: input, shape index: {}]
  %s3 = inlined_call_operand.vmem [shape: bf16[6,16,128], index: 3, kind: output, shape index: {0}]
  %s4 = inlined_call_operand.vmem [shape: f32[2,2,128], index: 4, kind: output, shape index: {1}]
  %5 = xla_tuple %s3, %s4
  %s6 = sld [smem:[#allocation0]]
  $region53: #{conv_1x3x3_forward.2} parent=0
    _
  %s8 = ssub.s32 1, %s6
  %s9 = scalar_select 0, %s8, %s6
  loop: start=0, step=1, limit=4
  $region2: #{conv_1x3x3_forward.2} parent=0 // loop_pre_header
    _
  $region3: #{conv_1x3x3_forward.2} parent=0 // loop_header
    %s11 = sphi 0, %s15
    %p12 = scmp.ge.s32.totalorder %s11, 4
    %s21 = sphi 0, %s23
    %s24 = sphi 0, %s21
    %s25 = sphi 0, %s24
    %s41 = sphi 0, %s25
    %s45 = sphi 0, %s45
    %s47 = sphi 0, %s45
    %s48 = sphi 0, %s47
    %s62 = sphi 0, %s48
    %s66 = sphi 0, %s66
    %s68 = sphi 0, %s66
    %s69 = sphi 0, %s68
    %s83 = sphi 0, %s69
    %s89 = sphi 0, %s91
    %s92 = sphi 0, %s89
    %s93 = sphi 0, %s92
    %s109 = sphi 0, %s93
    %s115 = sphi 0, %s117
    %s118 = sphi 0, %s115
    %s119 = sphi 0, %s118
    %s135 = sphi 0, %s119
  $region4: #{conv_1x3x3_forward.2} parent=0 // loop_header_branch
    %14 = sbr.rel (%p12) target = $region8
  $region5: #{conv_1x3x3_forward.2} parent=0 // loop_body
    %s16 = ssub.s32 %s11, 1
    %s17 = ssub.s32 %s11, 2
    %s18 = sadd.s32 %s11, 1
    %s19 = ssub.s32 %s11, %s18
    %p20 = scmp.eq.s32.totalorder %s19, 0
    %s22 = sadd.s32 %s21, 1
    %s23 = scalar_select %p20, %s21, %s22
    %p26 = pneg %p20
    %p27 = scmp.eq.s32.totalorder %s11, 1
    %p28 = por %p26, %p27
    %p29 = scmp.ne.s32.totalorder %s21, %s24
    %p30 = scmp.eq.s32.totalorder %s11, 0
    %p31 = por %p29, %p30
    %p32 = scmp.ne.s32.totalorder %s21, %s24
    %p33 = scmp.eq.s32.totalorder %s16, 1
    %p34 = por %p32, %p33
    %p35 = scmp.ne.s32.totalorder %s24, %s25
    %p36 = scmp.eq.s32.totalorder %s16, 0
    %p37 = por %p35, %p36
    %p38 = scmp.ne.s32.totalorder %s24, %s25
    %p39 = scmp.eq.s32.totalorder %s17, 1
    %p40 = por %p38, %p39
    %p42 = scmp.ne.s32.totalorder %s25, %s41
    %p43 = scmp.eq.s32.totalorder %s17, 0
    %p44 = por %p42, %p43
    %s46 = sadd.s32 %s45, 1
    %p49 = scmp.eq.s32.totalorder %s11, 1
    %p50 = scmp.ne.s32.totalorder %s45, %s47
    %p51 = scmp.eq.s32.totalorder %s11, 0
    %p52 = por %p50, %p51
    %p53 = scmp.ne.s32.totalorder %s45, %s47
    %p54 = scmp.eq.s32.totalorder %s16, 1
    %p55 = por %p53, %p54
    %p56 = scmp.ne.s32.totalorder %s47, %s48
    %p57 = scmp.eq.s32.totalorder %s16, 0
    %p58 = por %p56, %p57
    %p59 = scmp.ne.s32.totalorder %s47, %s48
    %p60 = scmp.eq.s32.totalorder %s17, 1
    %p61 = por %p59, %p60
    %p63 = scmp.ne.s32.totalorder %s48, %s62
    %p64 = scmp.eq.s32.totalorder %s17, 0
    %p65 = por %p63, %p64
    %s67 = sadd.s32 %s66, 1
    %p70 = scmp.eq.s32.totalorder %s11, 1
    %p71 = scmp.ne.s32.totalorder %s66, %s68
    %p72 = scmp.eq.s32.totalorder %s11, 0
    %p73 = por %p71, %p72
    %p74 = scmp.ne.s32.totalorder %s66, %s68
    %p75 = scmp.eq.s32.totalorder %s16, 1
    %p76 = por %p74, %p75
    %p77 = scmp.ne.s32.totalorder %s68, %s69
    %p78 = scmp.eq.s32.totalorder %s16, 0
    %p79 = por %p77, %p78
    %p80 = scmp.ne.s32.totalorder %s68, %s69
    %p81 = scmp.eq.s32.totalorder %s17, 1
    %p82 = por %p80, %p81
    %p84 = scmp.ne.s32.totalorder %s69, %s83
    %p85 = scmp.eq.s32.totalorder %s17, 0
    %p86 = por %p84, %p85
    %s87 = ssub.s32 %s11, %s18
    %p88 = scmp.eq.s32.totalorder %s87, 0
    %s90 = sadd.s32 %s89, 1
    %s91 = scalar_select %p88, %s89, %s90
    %p94 = pneg %p88
    %p95 = scmp.eq.s32.totalorder %s11, 1
    %p96 = por %p94, %p95
    %p97 = scmp.ne.s32.totalorder %s89, %s92
    %p98 = scmp.eq.s32.totalorder %s11, 0
    %p99 = por %p97, %p98
    %p100 = scmp.ne.s32.totalorder %s89, %s92
    %p101 = scmp.eq.s32.totalorder %s16, 1
    %p102 = por %p100, %p101
    %p103 = scmp.ne.s32.totalorder %s92, %s93
    %p104 = scmp.eq.s32.totalorder %s16, 0
    %p105 = por %p103, %p104
    %p106 = scmp.ne.s32.totalorder %s92, %s93
    %p107 = scmp.eq.s32.totalorder %s17, 1
    %p108 = por %p106, %p107
    %p110 = scmp.ne.s32.totalorder %s93, %s109
    %p111 = scmp.eq.s32.totalorder %s17, 0
    %p112 = por %p110, %p111
    %s113 = ssub.s32 %s11, %s18
    %p114 = scmp.eq.s32.totalorder %s113, 0
    %s116 = sadd.s32 %s115, 1
    %s117 = scalar_select %p114, %s115, %s116
    %p120 = pneg %p114
    %p121 = scmp.eq.s32.totalorder %s11, 1
    %p122 = por %p120, %p121
    %p123 = scmp.ne.s32.totalorder %s115, %s118
    %p124 = scmp.eq.s32.totalorder %s11, 0
    %p125 = por %p123, %p124
    %p126 = scmp.ne.s32.totalorder %s115, %s118
    %p127 = scmp.eq.s32.totalorder %s16, 1
    %p128 = por %p126, %p127
    %p129 = scmp.ne.s32.totalorder %s118, %s119
    %p130 = scmp.eq.s32.totalorder %s16, 0
    %p131 = por %p129, %p130
    %p132 = scmp.ne.s32.totalorder %s118, %s119
    %p133 = scmp.eq.s32.totalorder %s17, 1
    %p134 = por %p132, %p133
    %p136 = scmp.ne.s32.totalorder %s119, %s135
    %p137 = scmp.eq.s32.totalorder %s17, 0
    %p138 = por %p136, %p137
    %p139 = scmp.le.s32.totalorder 1, %s11
    %p140 = scmp.lt.s32.totalorder %s11, 3
    %p141 = pnand %p139, %p140
    %p142 = pneg %p141
    // Predicated region
    $region9: #{conv_1x3x3_forward.2} parent=5 // pred_check
      _
    $region10: #{conv_1x3x3_forward.2} parent=5 // pred_check_branch
      %144 = sbr.rel (%p141) target = $region12
    $region11: #{conv_1x3x3_forward.2} parent=5 // pred_region
      %s145 = ssub.s32 %s11, 1
      // Predicated region
      $region13: #{conv_1x3x3_forward.2} parent=11 // pred_check
        %p146 = pneg %p58
      $region14: #{conv_1x3x3_forward.2} parent=11 // pred_check_branch
        %148 = sbr.rel (%p146) target = $region16
      $region15: #{conv_1x3x3_forward.2} parent=11 // pred_region
        _
      $region16: #{conv_1x3x3_forward.2} parent=11 // pred_fallthru
        _
      // Predicated region
      $region17: #{conv_1x3x3_forward.2} parent=11 // pred_check
        %p149 = pneg %p79
      $region18: #{conv_1x3x3_forward.2} parent=11 // pred_check_branch
        %151 = sbr.rel (%p149) target = $region20
      $region19: #{conv_1x3x3_forward.2} parent=11 // pred_region
        _
      $region20: #{conv_1x3x3_forward.2} parent=11 // pred_fallthru
        _
    $region12: #{conv_1x3x3_forward.2} parent=5 // pred_fallthru
      _
    %p152 = scmp.lt.s32.totalorder %s11, 2
    // Predicated region
    $region21: #{conv_1x3x3_forward.2} parent=5 // pred_check
      %p153 = pneg %p152
    $region22: #{conv_1x3x3_forward.2} parent=5 // pred_check_branch
      %155 = sbr.rel (%p153) target = $region24
    $region23: #{conv_1x3x3_forward.2} parent=5 // pred_region
      // Predicated region
      $region25: #{conv_1x3x3_forward.2} parent=23 // pred_check
        %p156 = pneg %p31
      $region26: #{conv_1x3x3_forward.2} parent=23 // pred_check_branch
        %158 = sbr.rel (%p156) target = $region28
      $region27: #{conv_1x3x3_forward.2} parent=23 // pred_region
        %s159 = smul.u32 3, %s11
        %p160 = scmp.lt.s32.totalorder %s159, 5
        %s161 = scalar_select %p160, %s159, 5
        %s162 = smul.addr %s161, 2
        %s163 = smul.addr %s162, 4
        %s164 = scalar_lea.vmem %s0, %s163
        %s165 = smul.u32 3, %s11
      $region28: #{conv_1x3x3_forward.2} parent=23 // pred_fallthru
        _
    $region24: #{conv_1x3x3_forward.2} parent=5 // pred_fallthru
      _
    %p166 = scmp.le.s32.totalorder 1, %s11
    %p167 = scmp.lt.s32.totalorder %s11, 3
    %p168 = pnand %p166, %p167
    %p169 = pneg %p168
    // Predicated region
    $region29: #{conv_1x3x3_forward.2} parent=5 // pred_check
      _
    $region30: #{conv_1x3x3_forward.2} parent=5 // pred_check_branch
      %171 = sbr.rel (%p168) target = $region32
    $region31: #{conv_1x3x3_forward.2} parent=5 // pred_region
      %s172 = ssub.s32 %s11, 1
      %s173 = smul.u32 3, %s16
      %p174 = scmp.lt.s32.totalorder %s173, 5
      %s175 = scalar_select %p174, %s173, 5
      %s176 = smul.addr %s175, 2
      %s177 = smul.addr %s176, 4
      %s178 = scalar_lea.vmem %s0, %s177
      %p179 = pneg %p37
      %p180 = pneg %p34
      %p181 = pneg %p58
      %p182 = pneg %p55
      %p183 = pneg %p79
      %p184 = pneg %p76
      %p185 = pneg %p105
      %p186 = pneg %p102
      %s187 = smul.u32 3, %s16
      %p188 = scmp.lt.s32.totalorder %s187, 5
      %s189 = scalar_select %p188, %s187, 5
      %s190 = smul.addr %s189, 2
      %s191 = smul.addr %s190, 4
      %s192 = scalar_lea.vmem %s3, %s191
      %p193 = pneg %p131
      %p194 = pneg %p128
      %p195 = scmp.lt.s32.totalorder %s16, 1
      %s196 = scalar_select %p195, %s16, 1
      %s197 = smul.addr %s196, 2
      %s198 = scalar_lea.vmem %s4, %s197
      %s199 = smul.u32 3, %s16
      %p200 = scmp.lt.s32.totalorder %s199, 5
      %s201 = scalar_select %p200, %s199, 5
      %s202 = smul.addr %s201, 2
      %s203 = smul.addr %s202, 4
      %s204 = scalar_lea.vmem %s0, %s203
      %s205 = smul.u32 3, %s16
      %s206 = smul.u32 3, %s16
      %p207 = scmp.lt.s32.totalorder %s206, 5
      %s208 = scalar_select %p207, %s206, 5
      %s209 = smul.addr %s208, 2
      %s210 = smul.addr %s209, 4
      %s211 = scalar_lea.vmem %s3, %s210
      %s212 = smul.u32 3, %s16
      %p213 = scmp.lt.s32.totalorder %s16, 1
      %s214 = scalar_select %p213, %s16, 1
      %s215 = smul.addr %s214, 2
      %s216 = scalar_lea.vmem %s4, %s215
      %vm218 = vcmask 516096
      %vm219 = vsmask.f32 256
      %vm220 = vmand %vm218, %vm219
      %v221 = vld [vmem:[#allocation2] sm:$0x1]
      %v222 = vsel %vm220, 0, %v221
      %223 = vst [vmem:[#allocation2] sm:$0x1] %v222
      %v224 = vld [vmem:[#allocation2 + $0xc] sm:$0x1]
      %v225 = vsel %vm220, 0, %v224
      %226 = vst [vmem:[#allocation2 + $0xc] sm:$0x1] %v225
      %v227 = vld [vmem:[#allocation2 + $0x18] sm:$0x1]
      %v228 = vsel %vm220, 0, %v227
      %229 = vst [vmem:[#allocation2 + $0x18] sm:$0x1] %v228
      %vm230 = vsmask.f32 7938
      %vm231 = vmand %vm218, %vm230
      %v232 = vld [vmem:[#allocation2 + $0x8] sm:$0x1]
      %v233 = vsel %vm231, 0, %v232
      %234 = vst [vmem:[#allocation2 + $0x8] sm:$0x1] %v233
      %v235 = vld [vmem:[#allocation2 + $0x14] sm:$0x1]
      %v236 = vsel %vm231, 0, %v235
      %237 = vst [vmem:[#allocation2 + $0x14] sm:$0x1] %v236
      %v238 = vld [vmem:[#allocation2 + $0x20] sm:$0x1]
      %v239 = vsel %vm231, 0, %v238
      %240 = vst [vmem:[#allocation2 + $0x20] sm:$0x1] %v239
      %v241 = vld [vmem:[%s204] sm:$0xf]
      %v242 = vld [vmem:[%s204 + $0x4] sm:$0xf]
      %v243 = vld [vmem:[%s204 + $0x8] sm:$0xf]
      %v244 = vld [vmem:[%s204 + $0xc] sm:$0xf]
      %v245 = vld [vmem:[%s204 + $0x10] sm:$0xf]
      %v246 = vld [vmem:[%s204 + $0x14] sm:$0xf]
      %vm247 = vsmask.f32 4368
      %vm248 = vmor %vm219, %vm247
      %v250 = vshrl.u32 %v241, 16
      %v252 = vrot.slane %v250, 7
      %v253 = vshll.u32 %v241, 16
      %v255 = vor.u32 %v252, %v253
      %v256 = vrot.slane %v252, 4
      %v258 = vshrl.u32 %v242, 16
      %v260 = vrot.slane %v258, 7
      %v261 = vshll.u32 %v242, 16
      %v263 = vor.u32 %v260, %v261
      %v264 = vsel %vm248, %v256, %v263
      %v265 = vrot.slane %v260, 4
      %v267 = vshrl.u32 %v243, 16
      %v269 = vrot.slane %v267, 7
      %v270 = vshll.u32 %v243, 16
      %v272 = vor.u32 %v269, %v270
      %v273 = vrot.slane %v269, 4
      %v275 = vshrl.u32 %v244, 16
      %v277 = vrot.slane %v275, 7
      %v278 = vshll.u32 %v244, 16
      %v280 = vor.u32 %v277, %v278
      %v281 = vsel %vm248, %v273, %v280
      %v282 = vrot.slane %v277, 4
      %v284 = vshrl.u32 %v245, 16
      %v286 = vrot.slane %v284, 7
      %v287 = vshll.u32 %v245, 16
      %v289 = vor.u32 %v286, %v287
      %v290 = vrot.slane %v286, 4
      %v292 = vshrl.u32 %v246, 16
      %v294 = vrot.slane %v292, 7
      %v295 = vshll.u32 %v246, 16
      %v297 = vor.u32 %v294, %v295
      %v298 = vsel %vm248, %v290, %v297
      %v299 = vrot.slane %v294, 4
      %vm309 = vcmask 519168
      %vm310 = vmand %vm309, %vm230
      %v311 = vld [vmem:[#allocation2] sm:$0xf]
      %v312 = vsel %vm310, %v255, %v311
      %313 = vst [vmem:[#allocation2] sm:$0xf] %v312
      %vm314 = vcmask 519168
      %315 = vst.msk [vmem:[#allocation2 + $0x4] sm:$0xf] %vm314, %v264
      %v316 = vld [vmem:[#allocation2 + $0x8] sm:$0x1]
      %v317 = vsel %vm220, %v265, %v316
      %318 = vst [vmem:[#allocation2 + $0x8] sm:$0x1] %v317
      %v319 = vld [vmem:[#allocation2 + $0xc] sm:$0xf]
      %v320 = vsel %vm310, %v272, %v319
      %321 = vst [vmem:[#allocation2 + $0xc] sm:$0xf] %v320
      %322 = vst.msk [vmem:[#allocation2 + $0x10] sm:$0xf] %vm314, %v281
      %v323 = vld [vmem:[#allocation2 + $0x14] sm:$0x1]
      %v324 = vsel %vm220, %v282, %v323
      %325 = vst [vmem:[#allocation2 + $0x14] sm:$0x1] %v324
      %v326 = vld [vmem:[#allocation2 + $0x18] sm:$0xf]
      %v327 = vsel %vm310, %v289, %v326
      %328 = vst [vmem:[#allocation2 + $0x18] sm:$0xf] %v327
      %329 = vst.msk [vmem:[#allocation2 + $0x1c] sm:$0xf] %vm314, %v298
      %v330 = vld [vmem:[#allocation2 + $0x20] sm:$0x1]
      %v331 = vsel %vm220, %v299, %v330
      %332 = vst [vmem:[#allocation2 + $0x20] sm:$0x1] %v331
      %v333 = vld [vmem:[#allocation2] sm:$0xf]
      %v334 = vld [vmem:[#allocation2 + $0x4] sm:$0xf]
      %v335 = vld [vmem:[#allocation2 + $0xc] sm:$0xf]
      %v336 = vld [vmem:[#allocation2 + $0x10] sm:$0xf]
      %v337 = vld [vmem:[#allocation2 + $0x18] sm:$0xf]
      %v338 = vld [vmem:[#allocation2 + $0x1c] sm:$0xf]
      %v339 = vld [vmem:[%s1] sm:$0xf]
      %v340 = vld [vmem:[%s1 + $0x4] sm:$0xf]
      %v341 = vld [vmem:[%s1 + $0x8] sm:$0xf]
      %v342 = vld [vmem:[%s1 + $0xc] sm:$0xf]
      %v343 = vld [vmem:[%s1 + $0x10] sm:$0xf]
      %v344 = vld [vmem:[%s1 + $0x14] sm:$0xf]
      %v345 = vld [vmem:[%s1 + $0x18] sm:$0xf]
      %v346 = vld [vmem:[%s1 + $0x1c] sm:$0xf]
      %v347 = vld [vmem:[#allocation2 + $0x8] sm:$0x1]
      %v348 = vld [vmem:[#allocation2 + $0x14] sm:$0x1]
      %v349 = vld [vmem:[#allocation2 + $0x20] sm:$0x1]
      %vm350 = vsmask.f32 3328
      %vm351 = vsmask.f32 7440
      %vm352 = vmor %vm350, %vm351
      %v354 = vshrl.u32 %v333, 16
      %v356 = vrot.slane %v354, 4
      %v357 = vshll.u32 %v333, 16
      %v359 = vrot.slane %v357, 5
      %v360 = vor.u32 %v356, %v359
      %v361 = vrot.slane %v360, 4
      %v363 = vshll.u32 %v334, 16
      %v365 = vrot.slane %v363, 5
      %v366 = vsel %vm352, %v361, %v365
      %v367 = vshrl.u32 %v334, 16
      %v369 = vrot.slane %v367, 4
      %v370 = vor.u32 %v369, %v365
      %v371 = vrot.slane %v370, 4
      %v373 = vshll.u32 %v347, 16
      %v375 = vrot.slane %v373, 5
      %v376 = vsel %vm352, %v371, %v375
      %v378 = vshrl.u32 %v335, 16
      %v380 = vrot.slane %v378, 4
      %v381 = vshll.u32 %v335, 16
      %v383 = vrot.slane %v381, 5
      %v384 = vor.u32 %v380, %v383
      %v385 = vrot.slane %v384, 4
      %v387 = vshll.u32 %v336, 16
      %v389 = vrot.slane %v387, 5
      %v390 = vsel %vm352, %v385, %v389
      %v391 = vshrl.u32 %v336, 16
      %v393 = vrot.slane %v391, 4
      %v394 = vor.u32 %v393, %v389
      %v395 = vrot.slane %v394, 4
      %v397 = vshll.u32 %v348, 16
      %v399 = vrot.slane %v397, 5
      %v400 = vsel %vm352, %v395, %v399
      %v402 = vshrl.u32 %v337, 16
      %v404 = vrot.slane %v402, 4
      %v405 = vshll.u32 %v337, 16
      %v407 = vrot.slane %v405, 5
      %v408 = vor.u32 %v404, %v407
      %v409 = vrot.slane %v408, 4
      %v411 = vshll.u32 %v338, 16
      %v413 = vrot.slane %v411, 5
      %v414 = vsel %vm352, %v409, %v413
      %v415 = vshrl.u32 %v338, 16
      %v417 = vrot.slane %v415, 4
      %v418 = vor.u32 %v417, %v413
      %v419 = vrot.slane %v418, 4
      %v421 = vshll.u32 %v349, 16
      %v423 = vrot.slane %v421, 5
      %v424 = vsel %vm352, %v419, %v423
      %s425 = scalar_lea.vmem %s1, 32
      %v426 = vld [vmem:[%s425] sm:$0xf]
      %v427 = vld [vmem:[%s425 + $0x4] sm:$0xf]
      %v428 = vld [vmem:[%s425 + $0x8] sm:$0xf]
      %v429 = vld [vmem:[%s425 + $0xc] sm:$0xf]
      %v430 = vld [vmem:[%s425 + $0x10] sm:$0xf]
      %v431 = vld [vmem:[%s425 + $0x14] sm:$0xf]
      %v432 = vld [vmem:[%s425 + $0x18] sm:$0xf]
      %v433 = vld [vmem:[%s425 + $0x1c] sm:$0xf]
      %v434 = vunpack.c.l.b16 %v366
      %v435 = vunpack.c.l.b16 %v376
      %v436 = vunpack.c.l.b16 %v390
      %v437 = vunpack.c.l.b16 %v400
      %v438 = vunpack.c.l.b16 %v414
      %v439 = vunpack.c.l.b16 %v424
      %v440 = vpack.c.b16 %v435, %v434
      %v441 = vpack.c.b16 %v437, %v436
      %v442 = vpack.c.b16 %v439, %v438
      %v451 = vunpack.c.l.b16 %v426
      %v452 = vunpack.c.l.b16 %v427
      %v453 = vunpack.c.l.b16 %v428
      %v454 = vunpack.c.l.b16 %v429
      %v455 = vunpack.c.l.b16 %v430
      %v456 = vunpack.c.l.b16 %v431
      %v457 = vunpack.c.l.b16 %v432
      %v458 = vunpack.c.l.b16 %v433
      %v459 = vpack.c.b16 %v452, %v451
      %v460 = vpack.c.b16 %v454, %v453
      %v461 = vpack.c.b16 %v456, %v455
      %v462 = vpack.c.b16 %v458, %v457
      %vm467 = vcmask 523264
      %v469 = vsel %vm467, %v440, 0
      %v472 = vsel %vm467, %v441, 0
      %v475 = vsel %vm467, %v442, 0
      %477 = vmatprep.subr.bf16.mxu0 0
      %478 = vmatpush1.bf16.msra.mxu0 %v459
      %479 = vmatprep.subr.bf16.mxu0 0
      %480 = vmatpush1.bf16.msra.mxu0 %v460
      %481 = vmatprep.subr.bf16.mxu0 0
      %482 = vmatpush1.bf16.msra.mxu0 %v461
      %483 = vmatprep.subr.bf16.mxu0 0
      %484 = vmatpush1.bf16.msra.mxu0 %v462
      %485 = vmatprep.subr.bf16.mxu0 0
      %486 = vmatpush1.bf16.msra.mxu0 0
      %487 = vmatprep.subr.bf16.mxu0 0
      %488 = vmatpush1.bf16.msra.mxu0 0
      %489 = vmatprep.subr.bf16.mxu0 0
      %490 = vmatpush1.bf16.msra.mxu0 0
      %491 = vmatprep.subr.bf16.mxu0 0
      %492 = vmatpush1.bf16.msra.mxu0 0
      %493 = vmatprep.subr.bf16.mxu0 0
      %494 = vmatpush1.bf16.msra.mxu0 0
      %495 = vmatprep.subr.bf16.mxu0 0
      %496 = vmatpush1.bf16.msra.mxu0 0
      %497 = vmatprep.subr.bf16.mxu0 0
      %498 = vmatpush1.bf16.msra.mxu0 0
      %499 = vmatprep.subr.bf16.mxu0 0
      %500 = vmatpush1.bf16.msra.mxu0 0
      %501 = vmatprep.subr.bf16.mxu0 0
      %502 = vmatpush1.bf16.msra.mxu0 0
      %503 = vmatprep.subr.bf16.mxu0 0
      %504 = vmatpush1.bf16.msra.mxu0 0
      %505 = vmatprep.subr.bf16.mxu0 0
      %506 = vmatpush1.bf16.msra.mxu0 0
      %507 = vmatprep.subr.bf16.mxu0 0
      %508 = vmatpush1.bf16.msra.mxu0 0
      %509 = vmatprep.mubr.bf16.mxu0 0
      %510 = vmatmul.mubr.bf16.gmra.mrb[0].mxu0 %v469
      %v511 = vpop.f32.mrb[0].mxu0
      %v512 = vadd.f32 0.0, %v511
      %v513 = vpop.f32.mrb[0].mxu0
      %v514 = vpop.f32.mrb[0].mxu0
      %v515 = vadd.f32 0.0, %v514
      %v516 = vpop.f32.mrb[0].mxu0
      %517 = vmatprep.mubr.bf16.mxu0 0
      %518 = vmatmul.mubr.bf16.gmra.mrb[0].mxu0 %v472
      %v519 = vpop.f32.mrb[0].mxu0
      %v520 = vadd.f32 0.0, %v519
      %v521 = vpop.f32.mrb[0].mxu0
      %v522 = vpop.f32.mrb[0].mxu0
      %v523 = vadd.f32 0.0, %v522
      %v524 = vpop.f32.mrb[0].mxu0
      %525 = vmatprep.mubr.bf16.mxu0 0
      %526 = vmatmul.mubr.bf16.gmra.mrb[0].mxu0 %v475
      %v527 = vpop.f32.mrb[0].mxu0
      %v528 = vadd.f32 0.0, %v527
      %v529 = vpop.f32.mrb[0].mxu0
      %v530 = vpop.f32.mrb[0].mxu0
      %v531 = vadd.f32 0.0, %v530
      %v532 = vpop.f32.mrb[0].mxu0
      %533 = vdwg.mxu0
      %v540 = vunpack.c.l.b16 %v333
      %v541 = vunpack.c.l.b16 %v334
      %v542 = vunpack.c.l.b16 %v335
      %v543 = vunpack.c.l.b16 %v336
      %v544 = vunpack.c.l.b16 %v337
      %v545 = vunpack.c.l.b16 %v338
      %v546 = vpack.c.b16 %v541, %v540
      %v547 = vpack.c.b16 %v543, %v542
      %v548 = vpack.c.b16 %v545, %v544
      %v557 = vunpack.c.l.b16 %v339
      %v558 = vunpack.c.l.b16 %v340
      %v559 = vunpack.c.l.b16 %v341
      %v560 = vunpack.c.l.b16 %v342
      %v561 = vunpack.c.l.b16 %v343
      %v562 = vunpack.c.l.b16 %v344
      %v563 = vunpack.c.l.b16 %v345
      %v564 = vunpack.c.l.b16 %v346
      %v565 = vpack.c.b16 %v558, %v557
      %v566 = vpack.c.b16 %v560, %v559
      %v567 = vpack.c.b16 %v562, %v561
      %v568 = vpack.c.b16 %v564, %v563
      %v574 = vsel %vm467, %v546, 0
      %v577 = vsel %vm467, %v547, 0
      %v580 = vsel %vm467, %v548, 0
      %582 = vmatprep.subr.bf16.mxu0 0
      %583 = vmatpush1.bf16.msra.mxu0 %v565
      %584 = vmatprep.subr.bf16.mxu0 0
      %585 = vmatpush1.bf16.msra.mxu0 %v566
      %586 = vmatprep.subr.bf16.mxu0 0
      %587 = vmatpush1.bf16.msra.mxu0 %v567
      %588 = vmatprep.subr.bf16.mxu0 0
      %589 = vmatpush1.bf16.msra.mxu0 %v568
      %590 = vmatprep.subr.bf16.mxu0 0
      %591 = vmatpush1.bf16.msra.mxu0 0
      %592 = vmatprep.subr.bf16.mxu0 0
      %593 = vmatpush1.bf16.msra.mxu0 0
      %594 = vmatprep.subr.bf16.mxu0 0
      %595 = vmatpush1.bf16.msra.mxu0 0
      %596 = vmatprep.subr.bf16.mxu0 0
      %597 = vmatpush1.bf16.msra.mxu0 0
      %598 = vmatprep.subr.bf16.mxu0 0
      %599 = vmatpush1.bf16.msra.mxu0 0
      %600 = vmatprep.subr.bf16.mxu0 0
      %601 = vmatpush1.bf16.msra.mxu0 0
      %602 = vmatprep.subr.bf16.mxu0 0
      %603 = vmatpush1.bf16.msra.mxu0 0
      %604 = vmatprep.subr.bf16.mxu0 0
      %605 = vmatpush1.bf16.msra.mxu0 0
      %606 = vmatprep.subr.bf16.mxu0 0
      %607 = vmatpush1.bf16.msra.mxu0 0
      %608 = vmatprep.subr.bf16.mxu0 0
      %609 = vmatpush1.bf16.msra.mxu0 0
      %610 = vmatprep.subr.bf16.mxu0 0
      %611 = vmatpush1.bf16.msra.mxu0 0
      %612 = vmatprep.subr.bf16.mxu0 0
      %613 = vmatpush1.bf16.msra.mxu0 0
      %614 = vmatprep.mubr.bf16.mxu0 0
      %615 = vmatmul.mubr.bf16.gmra.mrb[0].mxu0 %v574
      %v616 = vpop.f32.mrb[0].mxu0
      %v617 = vadd.f32 %v512, %v616
      %v618 = vpop.f32.mrb[0].mxu0
      %v619 = vpop.f32.mrb[0].mxu0
      %v620 = vadd.f32 %v515, %v619
      %v621 = vpop.f32.mrb[0].mxu0
      %622 = vmatprep.mubr.bf16.mxu0 0
      %623 = vmatmul.mubr.bf16.gmra.mrb[0].mxu0 %v577
      %v624 = vpop.f32.mrb[0].mxu0
      %v625 = vadd.f32 %v520, %v624
      %v626 = vpop.f32.mrb[0].mxu0
      %v627 = vpop.f32.mrb[0].mxu0
      %v628 = vadd.f32 %v523, %v627
      %v629 = vpop.f32.mrb[0].mxu0
      %630 = vmatprep.mubr.bf16.mxu0 0
      %631 = vmatmul.mubr.bf16.gmra.mrb[0].mxu0 %v580
      %v632 = vpop.f32.mrb[0].mxu0
      %v633 = vadd.f32 %v528, %v632
      %v634 = vpop.f32.mrb[0].mxu0
      %v635 = vpop.f32.mrb[0].mxu0
      %v636 = vadd.f32 %v531, %v635
      %v637 = vpop.f32.mrb[0].mxu0
      %638 = vdwg.mxu0
      %v639 = vld [vmem:[#allocation2] sm:$0xe]
      %v640 = vld [vmem:[#allocation2 + $0xc] sm:$0xe]
      %v641 = vld [vmem:[#allocation2 + $0x18] sm:$0xe]
      %vm648 = vcmask 1042432
      %vm649 = vcmask 1046532
      %vm650 = vmor %vm648, %vm649
      %v651 = vrot.slane %v639, 5
      %v652 = vrot.slane %v651, 4
      %v653 = vrot.slane %v334, 5
      %v654 = vsel %vm650, %v652, %v653
      %v655 = vrot.slane %v653, 4
      %v656 = vrot.slane %v347, 5
      %v657 = vsel %vm650, %v655, %v656
      %v658 = vrot.slane %v640, 5
      %v659 = vrot.slane %v658, 4
      %v660 = vrot.slane %v336, 5
      %v661 = vsel %vm650, %v659, %v660
      %v662 = vrot.slane %v660, 4
      %v663 = vrot.slane %v348, 5
      %v664 = vsel %vm650, %v662, %v663
      %v665 = vrot.slane %v641, 5
      %v666 = vrot.slane %v665, 4
      %v667 = vrot.slane %v338, 5
      %v668 = vsel %vm650, %v666, %v667
      %v669 = vrot.slane %v667, 4
      %v670 = vrot.slane %v349, 5
      %v671 = vsel %vm650, %v669, %v670
      %s672 = scalar_lea.vmem %s1, 64
      %v673 = vld [vmem:[%s672] sm:$0xf]
      %v674 = vld [vmem:[%s672 + $0x4] sm:$0xf]
      %v675 = vld [vmem:[%s672 + $0x8] sm:$0xf]
      %v676 = vld [vmem:[%s672 + $0xc] sm:$0xf]
      %v677 = vld [vmem:[%s672 + $0x10] sm:$0xf]
      %v678 = vld [vmem:[%s672 + $0x14] sm:$0xf]
      %v679 = vld [vmem:[%s672 + $0x18] sm:$0xf]
      %v680 = vld [vmem:[%s672 + $0x1c] sm:$0xf]
      %v681 = vunpack.c.l.b16 %v654
      %v682 = vunpack.c.l.b16 %v657
      %v683 = vunpack.c.l.b16 %v661
      %v684 = vunpack.c.l.b16 %v664
      %v685 = vunpack.c.l.b16 %v668
      %v686 = vunpack.c.l.b16 %v671
      %v687 = vpack.c.b16 %v682, %v681
      %v688 = vpack.c.b16 %v684, %v683
      %v689 = vpack.c.b16 %v686, %v685
      %v698 = vunpack.c.l.b16 %v673
      %v699 = vunpack.c.l.b16 %v674
      %v700 = vunpack.c.l.b16 %v675
      %v701 = vunpack.c.l.b16 %v676
      %v702 = vunpack.c.l.b16 %v677
      %v703 = vunpack.c.l.b16 %v678
      %v704 = vunpack.c.l.b16 %v679
      %v705 = vunpack.c.l.b16 %v680
      %v706 = vpack.c.b16 %v699, %v698
      %v707 = vpack.c.b16 %v701, %v700
      %v708 = vpack.c.b16 %v703, %v702
      %v709 = vpack.c.b16 %v705, %v704
      %v715 = vsel %vm467, %v687, 0
      %v718 = vsel %vm467, %v688, 0
      %v721 = vsel %vm467, %v689, 0
      %723 = vmatprep.subr.bf16.mxu0 0
      %724 = vmatpush1.bf16.msra.mxu0 %v706
      %725 = vmatprep.subr.bf16.mxu0 0
      %726 = vmatpush1.bf16.msra.mxu0 %v707
      %727 = vmatprep.subr.bf16.mxu0 0
      %728 = vmatpush1.bf16.msra.mxu0 %v708
      %729 = vmatprep.subr.bf16.mxu0 0
      %730 = vmatpush1.bf16.msra.mxu0 %v709
      %731 = vmatprep.subr.bf16.mxu0 0
      %732 = vmatpush1.bf16.msra.mxu0 0
      %733 = vmatprep.subr.bf16.mxu0 0
      %734 = vmatpush1.bf16.msra.mxu0 0
      %735 = vmatprep.subr.bf16.mxu0 0
      %736 = vmatpush1.bf16.msra.mxu0 0
      %737 = vmatprep.subr.bf16.mxu0 0
      %738 = vmatpush1.bf16.msra.mxu0 0
      %739 = vmatprep.subr.bf16.mxu0 0
      %740 = vmatpush1.bf16.msra.mxu0 0
      %741 = vmatprep.subr.bf16.mxu0 0
      %742 = vmatpush1.bf16.msra.mxu0 0
      %743 = vmatprep.subr.bf16.mxu0 0
      %744 = vmatpush1.bf16.msra.mxu0 0
      %745 = vmatprep.subr.bf16.mxu0 0
      %746 = vmatpush1.bf16.msra.mxu0 0
      %747 = vmatprep.subr.bf16.mxu0 0
      %748 = vmatpush1.bf16.msra.mxu0 0
      %749 = vmatprep.subr.bf16.mxu0 0
      %750 = vmatpush1.bf16.msra.mxu0 0
      %751 = vmatprep.subr.bf16.mxu0 0
      %752 = vmatpush1.bf16.msra.mxu0 0
      %753 = vmatprep.subr.bf16.mxu0 0
      %754 = vmatpush1.bf16.msra.mxu0 0
      %755 = vmatprep.mubr.bf16.mxu0 0
      %756 = vmatmul.mubr.bf16.gmra.mrb[0].mxu0 %v715
      %v757 = vpop.f32.mrb[0].mxu0
      %v758 = vadd.f32 0.0, %v757
      %v759 = vpop.f32.mrb[0].mxu0
      %v760 = vpop.f32.mrb[0].mxu0
      %v761 = vadd.f32 0.0, %v760
      %v762 = vpop.f32.mrb[0].mxu0
      %763 = vmatprep.mubr.bf16.mxu0 0
      %764 = vmatmul.mubr.bf16.gmra.mrb[0].mxu0 %v718
      %v765 = vpop.f32.mrb[0].mxu0
      %v766 = vadd.f32 0.0, %v765
      %v767 = vpop.f32.mrb[0].mxu0
      %v768 = vpop.f32.mrb[0].mxu0
      %v769 = vadd.f32 0.0, %v768
      %v770 = vpop.f32.mrb[0].mxu0
      %771 = vmatprep.mubr.bf16.mxu0 0
      %772 = vmatmul.mubr.bf16.gmra.mrb[0].mxu0 %v721
      %v773 = vpop.f32.mrb[0].mxu0
      %v774 = vadd.f32 0.0, %v773
      %v775 = vpop.f32.mrb[0].mxu0
      %v776 = vpop.f32.mrb[0].mxu0
      %v777 = vadd.f32 0.0, %v776
      %v778 = vpop.f32.mrb[0].mxu0
      %779 = vdwg.mxu0
      %v780 = vadd.f32 %v617, %v758
      %v781 = vadd.f32 %v620, %v761
      %v782 = vadd.f32 %v625, %v766
      %v783 = vadd.f32 %v628, %v769
      %v784 = vadd.f32 %v633, %v774
      %v785 = vadd.f32 %v636, %v777
      %v786 = vld [vmem:[%s2] sm:$0x1]
      %v788 = vlaneseq
      %v789 = vshrl.u32 %v788, 7
      %v790 = vsub.s32 0, %v789
      %v791 = vrot.slane %v786, %v790
      %v793 = vadd.f32 %v780, %v791
      %v794 = vadd.f32 %v781, %v791
      %v795 = vadd.f32 %v782, %v791
      %v796 = vadd.f32 %v783, %v791
      %v797 = vadd.f32 %v784, %v791
      %v798 = vadd.f32 %v785, %v791
      %v799 = vpack.c.bf16 %v794, %v793
      %v800 = vpack.c.bf16 %v796, %v795
      %v801 = vpack.c.bf16 %v798, %v797
      %v805 = vunpack.c.l.b16 %v799
      %v806 = vunpack.c.h.b16 %v799
      %v807 = vunpack.c.l.b16 %v800
      %v808 = vunpack.c.h.b16 %v800
      %v809 = vunpack.c.l.b16 %v801
      %v810 = vunpack.c.h.b16 %v801
      %v811 = vpack.c.b16 %v805, %v805
      %v812 = vpack.c.b16 %v806, %v806
      %v813 = vpack.c.b16 %v807, %v807
      %v814 = vpack.c.b16 %v808, %v808
      %v815 = vpack.c.b16 %v809, %v809
      %v816 = vpack.c.b16 %v810, %v810
      %823 = vst [vmem:[%s211] sm:$0xf] %v811
      %824 = vst [vmem:[%s211 + $0x4] sm:$0xf] %v812
      %825 = vst [vmem:[%s211 + $0x8] sm:$0xf] %v813
      %826 = vst [vmem:[%s211 + $0xc] sm:$0xf] %v814
      %827 = vst [vmem:[%s211 + $0x10] sm:$0xf] %v815
      %828 = vst [vmem:[%s211 + $0x14] sm:$0xf] %v816
      %v829 = vadd.f32 %v793, %v794
      %v830 = vadd.f32 %v829, %v795
      %v831 = vadd.f32 %v830, %v796
      %v832 = vadd.f32 %v831, %v797
      %v833 = vadd.f32 %v832, %v798
      %v834 = vrot.slane %v833, 4
      %v835 = vadd.f32 %v833, %v834
      %v836 = vrot.slane %v835, 2
      %v837 = vadd.f32 %v835, %v836
      %v838 = vrot.slane %v837, 1
      %v839 = vadd.f32 %v837, %v838
      %v840 = vmul.f32 %v793, %v793
      %v841 = vmul.f32 %v794, %v794
      %v842 = vmul.f32 %v795, %v795
      %v843 = vmul.f32 %v796, %v796
      %v844 = vmul.f32 %v797, %v797
      %v845 = vmul.f32 %v798, %v798
      %v846 = vadd.f32 %v840, %v841
      %v847 = vadd.f32 %v846, %v842
      %v848 = vadd.f32 %v847, %v843
      %v849 = vadd.f32 %v848, %v844
      %v850 = vadd.f32 %v849, %v845
      %v851 = vrot.slane %v850, 4
      %v852 = vadd.f32 %v850, %v851
      %v853 = vrot.slane %v852, 2
      %v854 = vadd.f32 %v852, %v853
      %v855 = vrot.slane %v854, 1
      %v856 = vadd.f32 %v854, %v855
      %vm857 = vcmask 1040384
      %v858 = vsel %vm857, %v839, %v856
      %859 = vst [vmem:[%s216] sm:$0x3] %v858
      %s860 = smul.u32 3, %s16
      %p861 = scmp.lt.s32.totalorder %s860, 5
      %s862 = scalar_select %p861, %s860, 5
      %s863 = smul.addr %s862, 2
      %s864 = smul.addr %s863, 4
      %s865 = scalar_lea.vmem %s3, %s864
      %p866 = scmp.lt.s32.totalorder %s16, 1
      %s867 = scalar_select %p866, %s16, 1
      %s868 = smul.addr %s867, 2
      %s869 = scalar_lea.vmem %s4, %s868
      // Predicated region
      $region33: #{conv_1x3x3_forward.2} parent=31 // pred_check
        %p870 = pneg %p102
      $region34: #{conv_1x3x3_forward.2} parent=31 // pred_check_branch
        %872 = sbr.rel (%p870) target = $region36
      $region35: #{conv_1x3x3_forward.2} parent=31 // pred_region
        %s873 = smul.u32 3, %s16
      $region36: #{conv_1x3x3_forward.2} parent=31 // pred_fallthru
        _
      // Predicated region
      $region37: #{conv_1x3x3_forward.2} parent=31 // pred_check
        %p874 = pneg %p128
      $region38: #{conv_1x3x3_forward.2} parent=31 // pred_check_branch
        %876 = sbr.rel (%p874) target = $region40
      $region39: #{conv_1x3x3_forward.2} parent=31 // pred_region
        _
      $region40: #{conv_1x3x3_forward.2} parent=31 // pred_fallthru
        _
    $region32: #{conv_1x3x3_forward.2} parent=5 // pred_fallthru
      _
    %p877 = scmp.le.s32.totalorder 2, %s11
    // Predicated region
    $region41: #{conv_1x3x3_forward.2} parent=5 // pred_check
      %p878 = pneg %p877
    $region42: #{conv_1x3x3_forward.2} parent=5 // pred_check_branch
      %880 = sbr.rel (%p878) target = $region44
    $region43: #{conv_1x3x3_forward.2} parent=5 // pred_region
      %s881 = ssub.s32 %s11, 2
      // Predicated region
      $region45: #{conv_1x3x3_forward.2} parent=43 // pred_check
        %p882 = pneg %p108
      $region46: #{conv_1x3x3_forward.2} parent=43 // pred_check_branch
        %884 = sbr.rel (%p882) target = $region48
      $region47: #{conv_1x3x3_forward.2} parent=43 // pred_region
        %s885 = smul.u32 3, %s17
        %p886 = scmp.lt.s32.totalorder %s885, 5
        %s887 = scalar_select %p886, %s885, 5
        %s888 = smul.addr %s887, 2
        %s889 = smul.addr %s888, 4
        %s890 = scalar_lea.vmem %s3, %s889
      $region48: #{conv_1x3x3_forward.2} parent=43 // pred_fallthru
        _
      // Predicated region
      $region49: #{conv_1x3x3_forward.2} parent=43 // pred_check
        %p891 = pneg %p134
      $region50: #{conv_1x3x3_forward.2} parent=43 // pred_check_branch
        %893 = sbr.rel (%p891) target = $region52
      $region51: #{conv_1x3x3_forward.2} parent=43 // pred_region
        %p894 = scmp.lt.s32.totalorder %s17, 1
        %s895 = scalar_select %p894, %s17, 1
        %s896 = smul.addr %s895, 2
        %s897 = scalar_lea.vmem %s4, %s896
      $region52: #{conv_1x3x3_forward.2} parent=43 // pred_fallthru
        _
    $region44: #{conv_1x3x3_forward.2} parent=5 // pred_fallthru
      _
  $region6: #{conv_1x3x3_forward.2} parent=0 // loop_footer
    %s15 = sadd.s32 1, %s11
  $region7: #{conv_1x3x3_forward.2} parent=0 // loop_footer_branch
    %10 = sbr.rel target = $region3
  $region8: #{conv_1x3x3_forward.2} parent=0 // loop_exit
    _

</llo_original>
